<compile_context>
chip_gen: v5e
topology: v5e:2x2
jax: 0.10.0
libtpu: 0.0.40
codegen_flags: <defaults>
</compile_context>

<pallas_src>
import jax
import jax.numpy as jnp
from jax.experimental import pallas as pl
from jax.experimental.pallas import tpu as pltpu


def _round_up(a, b):
    return (a + b - 1) // b * b


def _molmo_mlp_kernel(x_ref, wgu_ref, wd_ref, o_ref, acc_ref):
    """One (token_tile x i_tile) step.

    wgu_ref holds the *interleaved* gate/up weight tile (H, 2*i_tile):
    columns [:i_tile] are this I-tile's gate columns, [i_tile:] its up
    columns, so a single MXU matmul produces both halves.
    """
    k = pl.program_id(1)

    @pl.when(k == 0)
    def _init():
        acc_ref[...] = jnp.zeros_like(acc_ref)

    x = x_ref[...]
    # Fused gate/up matmul (N = 2*i_tile); lane-aligned split, no copy.
    gu = jnp.dot(x, wgu_ref[...], preferred_element_type=jnp.float32)
    i_tile = gu.shape[1] // 2
    gate = gu[:, :i_tile]
    up = gu[:, i_tile:]
    # SiluAndMul in f32 (logistic lowers to the EUP slot).
    h = gate * jax.lax.logistic(gate) * up
    # down_proj partial sum for this I-tile, accumulated in f32 scratch.
    acc_ref[...] += jnp.dot(h.astype(wd_ref.dtype), wd_ref[...],
                            preferred_element_type=jnp.float32)

    @pl.when(k == pl.num_programs(1) - 1)
    def _finalize():
        o_ref[...] = acc_ref[...].astype(o_ref.dtype)


def _tpu_caps():
    """Return (physical VMEM bytes per core, preferred i-tile granularity)."""
    kind = ""
    try:
        kind = jax.devices()[0].device_kind.lower()
    except Exception:
        pass
    if "v7" in kind:
        vmem_phys, gran = 64 << 20, 256     # v7x: 64 MiB / TC, 2x256x256 MXU
    elif "v6" in kind:
        vmem_phys, gran = 128 << 20, 256    # v6e: 128 MiB, 2x256x256 MXU
    elif "v5" in kind or "v4" in kind or "v3" in kind or "v2" in kind:
        vmem_phys, gran = 128 << 20, 128    # v5e & older: 128x128 MXU
    else:
        vmem_phys, gran = 64 << 20, 256     # unknown: conservative
    try:  # authoritative value when the query is available
        vmem_phys = int(pltpu.get_tpu_info().vmem_capacity_bytes)
    except Exception:
        pass
    return vmem_phys, gran


def molmo_mlp(x, w_gate_up, w_down, *, token_tile=None, i_tile=None,
              compute_dtype=None, vmem_budget_bytes=None):
    """MolmoMLP forward: out = (silu(x@Wg) * (x@Wu)) @ Wd.

    x:         (T, H)
    w_gate_up: (H, 2*I)  (PyTorch gate_up_proj.weight is (2I, H); pre-transposed)
    w_down:    (I, H)    (PyTorch down_proj.weight is (H, I);   pre-transposed)
    compute_dtype: operand dtype inside the kernel (e.g. jnp.bfloat16 for full
      MXU rate on v6e/v7x). Accumulation is always f32; output keeps x's dtype.
    """
    T, H = x.shape
    assert w_gate_up.shape[0] == H and w_gate_up.shape[1] % 2 == 0
    I = w_gate_up.shape[1] // 2
    assert w_down.shape == (I, H)
    out_dtype = x.dtype

    if compute_dtype is not None:
        x = x.astype(compute_dtype)
        w_gate_up = w_gate_up.astype(compute_dtype)
        w_down = w_down.astype(compute_dtype)

    x_bytes = jnp.dtype(x.dtype).itemsize
    w_bytes = jnp.dtype(w_gate_up.dtype).itemsize
    out_bytes = jnp.dtype(out_dtype).itemsize

    vmem_phys, gran = _tpu_caps()
    if vmem_budget_bytes is None:
        # Leave headroom below physical VMEM: ~56 MiB on v7x, ~100 MiB on v5e/v6e.
        vmem_budget_bytes = min(vmem_phys - (8 << 20), 100 << 20)
    vmem_budget_bytes = min(vmem_budget_bytes, vmem_phys - (4 << 20))

    # token-tile alignment follows sublane packing (8 f32, 16 bf16, 32 int8/fp8)
    token_align = max(8, 32 // x_bytes)

    def vmem_est(tt, it):
        weights = 2 * 3 * H * it * w_bytes            # fused gate/up + down, double-buffered
        tokens = 2 * tt * H * (x_bytes + out_bytes)   # x + out tiles, double-buffered
        acc = tt * H * 4                              # f32 accumulator scratch
        return weights + tokens + acc

    # ---- token tiling (generation-aware): large enough to be MXU-bound ----
    auto_token = token_tile is None
    if auto_token:
        target = 1024 if vmem_budget_bytes >= (80 << 20) else 512
        token_tile = min(target, _round_up(T, token_align))
    token_tile = max(token_align, _round_up(token_tile, token_align))
    if auto_token:
        while (token_tile > token_align
               and vmem_est(token_tile, gran) > vmem_budget_bytes):
            token_tile = max(token_align, _round_up(token_tile // 2, token_align))

    # ---- intermediate (I) tiling: stream weight tiles; pad I so any tile fits ----
    if i_tile is None:
        max_i = _round_up(I, gran)
        cands = [c for c in range(gran, min(max_i, 4096) + 1, gran)
                 if vmem_est(token_tile, c) <= vmem_budget_bytes]
        if cands:
            # least padding waste first, then largest tile (fewest K steps)
            i_tile = min(cands, key=lambda c: (_round_up(I, c), -c))
        else:
            i_tile = gran
    i_tile = max(128, _round_up(i_tile, 128))

    n_k = pl.cdiv(I, i_tile)
    I_pad = n_k * i_tile

    T_pad = _round_up(T, token_tile)
    if T_pad != T:
        x = jnp.pad(x, ((0, T_pad - T), (0, 0)))

    # ---- weight prep: pad I and interleave gate/up per I-tile so one wide
    #      (H, 2*i_tile) block feeds a single fused matmul per step.
    #      (In production, hoist this one-time transform out of the hot path.)
    wg = w_gate_up[:, :I]
    wu = w_gate_up[:, I:]
    if I_pad != I:
        pad = ((0, 0), (0, I_pad - I))
        wg = jnp.pad(wg, pad)
        wu = jnp.pad(wu, pad)
        w_down = jnp.pad(w_down, ((0, I_pad - I), (0, 0)))
    w_fused = jnp.concatenate(
        [wg.reshape(H, n_k, i_tile), wu.reshape(H, n_k, i_tile)], axis=-1
    ).reshape(H, 2 * I_pad)

    grid = (T_pad // token_tile, n_k)

    est = vmem_est(token_tile, i_tile)
    vmem_limit = int(min(vmem_phys - (4 << 20), max(32 << 20, int(est * 1.4))))

    cost = pl.CostEstimate(
        flops=6 * T_pad * H * I_pad,
        transcendentals=T_pad * I_pad,
        bytes_accessed=(T_pad * H * x_bytes                       # x
                        + grid[0] * 3 * H * I_pad * w_bytes       # weights, re-streamed per token block
                        + T_pad * H * out_bytes))                 # out

    out = pl.pallas_call(
        _molmo_mlp_kernel,
        out_shape=jax.ShapeDtypeStruct((T_pad, H), out_dtype),
        grid_spec=pltpu.PrefetchScalarGridSpec(
            num_scalar_prefetch=0,
            grid=grid,
            in_specs=[
                pl.BlockSpec((token_tile, H), lambda i, k: (i, 0)),   # x tile
                pl.BlockSpec((H, 2 * i_tile), lambda i, k: (0, k)),   # fused gate/up tile
                pl.BlockSpec((i_tile, H), lambda i, k: (k, 0)),       # down tile
            ],
            out_specs=pl.BlockSpec((token_tile, H), lambda i, k: (i, 0)),
            scratch_shapes=[pltpu.VMEM((token_tile, H), jnp.float32)],
        ),
        compiler_params=pltpu.CompilerParams(
            dimension_semantics=("parallel", "arbitrary"),
            vmem_limit_bytes=vmem_limit),
        cost_estimate=cost,
    )(x, w_fused, w_down)

    return out[:T] if T_pad != T else out


def molmo_mlp_reference(x, w_gate_up, w_down):
    I = w_gate_up.shape[1] // 2
    gate_up = jnp.dot(x, w_gate_up, precision=jax.lax.Precision.HIGHEST)
    gate, up = gate_up[:, :I], gate_up[:, I:]
    h = jax.nn.silu(gate) * up
    return jnp.dot(h, w_down, precision=jax.lax.Precision.HIGHEST)


if __name__ == "__main__":
    # Small config consistent with MolmoMLP:
    #   config.hidden_size = 256
    #   config.intermediate_size = 720 -> self.intermediate_size = 360
    # I=360 is NOT a multiple of 128 (exercises the I-padding path) and
    # num_tokens=24 is not a multiple of the token tile (exercises T padding).
    hidden_size = 256
    intermediate_size = 720 // 2
    num_tokens = 24

    key = jax.random.PRNGKey(0)
    kx, kgu, kd = jax.random.split(key, 3)

    x = jax.random.normal(kx, (num_tokens, hidden_size), dtype=jnp.float32)
    # gate_up_proj.weight in PyTorch is (2*I, H); stored pre-transposed (H, 2*I).
    w_gate_up = (jax.random.normal(kgu, (hidden_size, 2 * intermediate_size),
                                   dtype=jnp.float32) * 0.05)
    # down_proj.weight in PyTorch is (H, I); stored pre-transposed (I, H).
    w_down = (jax.random.normal(kd, (intermediate_size, hidden_size),
                                dtype=jnp.float32) * 0.05)

    ref = molmo_mlp_reference(x, w_gate_up, w_down)

    # 1) Auto-tiled path (generation-aware token/i tile pick).
    out_auto = jax.block_until_ready(molmo_mlp(x, w_gate_up, w_down))
    assert out_auto.shape == (num_tokens, hidden_size)
    assert jnp.allclose(out_auto, ref, atol=2e-3, rtol=2e-3), \
        "f32 auto-tiled mismatch vs reference"

    # 2) Explicit small tiles: multi-step K accumulation + token & I padding.
    out_tiled = jax.block_until_ready(
        molmo_mlp(x, w_gate_up, w_down, token_tile=16, i_tile=128))
    assert jnp.allclose(out_tiled, ref, atol=2e-3, rtol=2e-3), \
        "f32 tiled mismatch vs reference"

    # 3) bf16 operands (recommended on v6e/v7x); f32 accumulation inside,
    #    output stays in the caller's dtype.
    out_bf16 = jax.block_until_ready(
        molmo_mlp(x, w_gate_up, w_down, compute_dtype=jnp.bfloat16,
                  token_tile=16, i_tile=128))
    assert out_bf16.dtype == x.dtype
    assert jnp.allclose(out_bf16, ref, atol=1.5e-1, rtol=1.5e-1), \
        "bf16 mismatch vs reference"

    print("KERNEL_OK")
</pallas_src>

<mosaic_0001>
module attributes {stable_mosaic.version = 11 : i64} {
  func.func @_molmo_mlp_kernel(%arg0: i32, %arg1: i32, %arg2: memref<24x256xf32, #tpu.memory_space<vmem>>, %arg3: memref<256x1024xf32, #tpu.memory_space<vmem>>, %arg4: memref<512x256xf32, #tpu.memory_space<vmem>>, %arg5: memref<24x256xf32, #tpu.memory_space<vmem>>, %arg6: memref<24x256xf32, #tpu.memory_space<vmem>>) attributes {dimension_semantics = [#tpu.dimension_semantics<parallel>, #tpu.dimension_semantics<arbitrary>], iteration_bounds = array<i64: 1, 1>, scalar_prefetch = 0 : i64, scratch_operands = 1 : i64, tpu.core_type = #tpu.core_type<tc>, window_params = [{transform_indices = @transform_0, window_bounds = array<i64: 24, 256>}, {transform_indices = @transform_1, window_bounds = array<i64: 256, 1024>}, {transform_indices = @transform_2, window_bounds = array<i64: 512, 256>}, {transform_indices = @transform_3, window_bounds = array<i64: 24, 256>}]} {
    %c0_i32 = arith.constant 0 : i32
    %0 = arith.cmpi eq, %arg1, %c0_i32 : i32
    %1 = arith.extui %0 : i1 to i32
    %c0_i32_0 = arith.constant 0 : i32
    %2 = arith.cmpi ne, %1, %c0_i32_0 : i32
    scf.if %2 {
      %cst_14 = arith.constant 0.000000e+00 : f32
      %23 = vector.broadcast %cst_14 : f32 to vector<24x256xf32>
      %c0_15 = arith.constant 0 : index
      %c0_16 = arith.constant 0 : index
      %24 = vector.load %arg6[%c0_15, %c0_16] : memref<24x256xf32, #tpu.memory_space<vmem>>, vector<24x256xf32>
      tpu.vector_store %arg6[%c0_15, %c0_16], %23 {strides = array<i32>} : memref<24x256xf32, #tpu.memory_space<vmem>>, vector<24x256xf32>,
    } else {
    }
    %c0 = arith.constant 0 : index
    %c0_1 = arith.constant 0 : index
    %3 = vector.load %arg2[%c0, %c0_1] : memref<24x256xf32, #tpu.memory_space<vmem>>, vector<24x256xf32>
    %c0_2 = arith.constant 0 : index
    %c0_3 = arith.constant 0 : index
    %4 = vector.load %arg3[%c0_2, %c0_3] : memref<256x1024xf32, #tpu.memory_space<vmem>>, vector<256x1024xf32>
    %cst = arith.constant dense<0.000000e+00> : vector<24x1024xf32>
    %5 = tpu.matmul %3, %4, %cst {dimension_numbers = #tpu.dot_dimension_numbers<[1], [0], [0], [1], [0, 0, 1, 1], [], []>} : vector<24x256xf32>, vector<256x1024xf32>, vector<24x1024xf32> -> vector<24x1024xf32>
    %6 = vector.extract_strided_slice %5 {offsets = [0, 0], sizes = [24, 512], strides = [1, 1]} : vector<24x1024xf32> to vector<24x512xf32>
    %7 = vector.extract_strided_slice %5 {offsets = [0, 512], sizes = [24, 512], strides = [1, 1]} : vector<24x1024xf32> to vector<24x512xf32>
    %8 = arith.negf %6 : vector<24x512xf32>
    %9 = math.exp %8 : vector<24x512xf32>
    %cst_4 = arith.constant 1.000000e+00 : f32
    %10 = vector.broadcast %cst_4 : f32 to vector<24x512xf32>
    %11 = arith.addf %10, %9 : vector<24x512xf32>
    %12 = arith.divf %10, %11 : vector<24x512xf32>
    %13 = arith.mulf %6, %12 : vector<24x512xf32>
    %14 = arith.mulf %13, %7 : vector<24x512xf32>
    %c0_5 = arith.constant 0 : index
    %c0_6 = arith.constant 0 : index
    %15 = vector.load %arg6[%c0_5, %c0_6] : memref<24x256xf32, #tpu.memory_space<vmem>>, vector<24x256xf32>
    %c0_7 = arith.constant 0 : index
    %c0_8 = arith.constant 0 : index
    %16 = vector.load %arg4[%c0_7, %c0_8] : memref<512x256xf32, #tpu.memory_space<vmem>>, vector<512x256xf32>
    %cst_9 = arith.constant dense<0.000000e+00> : vector<24x256xf32>
    %17 = tpu.matmul %14, %16, %cst_9 {dimension_numbers = #tpu.dot_dimension_numbers<[1], [0], [0], [1], [0, 0, 1, 1], [], []>} : vector<24x512xf32>, vector<512x256xf32>, vector<24x256xf32> -> vector<24x256xf32>
    %18 = arith.addf %15, %17 : vector<24x256xf32>
    %c0_10 = arith.constant 0 : index
    %c0_11 = arith.constant 0 : index
    %19 = vector.load %arg6[%c0_10, %c0_11] : memref<24x256xf32, #tpu.memory_space<vmem>>, vector<24x256xf32>
    tpu.vector_store %arg6[%c0_10, %c0_11], %18 {strides = array<i32>} : memref<24x256xf32, #tpu.memory_space<vmem>>, vector<24x256xf32>,
    %c0_i32_12 = arith.constant 0 : i32
    %20 = arith.cmpi eq, %arg1, %c0_i32_12 : i32
    %21 = arith.extui %20 : i1 to i32
    %c0_i32_13 = arith.constant 0 : i32
    %22 = arith.cmpi ne, %21, %c0_i32_13 : i32
    scf.if %22 {
      %c0_14 = arith.constant 0 : index
      %c0_15 = arith.constant 0 : index
      %23 = vector.load %arg6[%c0_14, %c0_15] : memref<24x256xf32, #tpu.memory_space<vmem>>, vector<24x256xf32>
      %c0_16 = arith.constant 0 : index
      %c0_17 = arith.constant 0 : index
      %24 = vector.load %arg5[%c0_16, %c0_17] : memref<24x256xf32, #tpu.memory_space<vmem>>, vector<24x256xf32>
      tpu.vector_store %arg5[%c0_16, %c0_17], %23 {strides = array<i32>} : memref<24x256xf32, #tpu.memory_space<vmem>>, vector<24x256xf32>,
    } else {
    }
    return
  }
  func.func @transform_0(%arg0: i32, %arg1: i32) -> (i32, i32) {
    %c0_i32 = arith.constant 0 : i32
    %c0_i32_0 = arith.constant 0 : i32
    return %arg0, %c0_i32 : i32, i32
  }
  func.func @transform_1(%arg0: i32, %arg1: i32) -> (i32, i32) {
    %c0_i32 = arith.constant 0 : i32
    %c0_i32_0 = arith.constant 0 : i32
    return %c0_i32, %arg1 : i32, i32
  }
  func.func @transform_2(%arg0: i32, %arg1: i32) -> (i32, i32) {
    %c0_i32 = arith.constant 0 : i32
    %c0_i32_0 = arith.constant 0 : i32
    return %arg1, %c0_i32 : i32, i32
  }
  func.func @transform_3(%arg0: i32, %arg1: i32) -> (i32, i32) {
    %c0_i32 = arith.constant 0 : i32
    %c0_i32_0 = arith.constant 0 : i32
    return %arg0, %c0_i32 : i32, i32
  }
}

</mosaic_0001>

<llo_original>
// kernel: tpu_custom_call.1
$region0: #{tpu_custom_call.1}
  #allocation0 [shape = 'u32[]', space=smem, size = 0x4, offset = 0x4, fixed_abs, tag = 'smem constant byte address 0x4 - core index']
  #allocation1 [shape = 'u32[72,128]{1,0:T(1,128)}', space=vmem, size = 0x9000, scoped, tag = 'internal scratch']
  #allocation2 [shape = 'f32[24,256]{1,0:T(8,128)}', space=vmem, size = 0x6000, scoped, tag = 'scratch operand']
  %s0 = inlined_call_operand.hbm [shape: f32[24,256], index: 0, kind: input, shape index: {}]
  %s1 = inlined_call_operand.hbm [shape: f32[256,1024], index: 1, kind: input, shape index: {}]
  %s2 = inlined_call_operand.hbm [shape: f32[512,256], index: 2, kind: input, shape index: {}]
  %s3 = inlined_call_operand.hbm [shape: f32[24,256], index: 3, kind: output, shape index: {}]
  %s4 = sld [smem:[#allocation0]]
  $region42: #{tpu_custom_call.1} parent=0
    _
  %s6 = ssub.s32 1, %s4
  %s7 = scalar_select 0, %s6, %s4
  $region1: #{tpu_custom_call.1} parent=0
    #allocation3 [shape = 'u8[24576]{0}', space=vmem, size = 0x6000, scoped, tag = 'input window, operand 0, single buffered']
    #allocation4 [shape = 's32[1]{0}', space=sflag, size = 0x4, scoped, tag = 'scoped memory for tpu_custom_call.1']
    #allocation5 [shape = 's32[1]{0}', space=sflag, size = 0x4, scoped, tag = 'scoped memory for tpu_custom_call.1']
    #allocation6 [shape = 'u8[1048576]{0}', space=vmem, size = 0x100000, scoped, tag = 'input window, operand 1, single buffered']
    #allocation7 [shape = 's32[1]{0}', space=sflag, size = 0x4, scoped, tag = 'scoped memory for tpu_custom_call.1']
    #allocation8 [shape = 'u8[524288]{0}', space=vmem, size = 0x80000, scoped, tag = 'input window, operand 2, single buffered']
    #allocation9 [shape = 'u8[24576]{0}', space=vmem, size = 0x6000, scoped, tag = 'output window, operand 0, single buffered']
    %8 = vsyncpa [#allocation4], 0
    %9 = vsyncpa [#allocation7], 0
    %10 = vsyncpa [#allocation5], 0
    // Predicated region
    $region2: #{tpu_custom_call.1} parent=1 // pred_check
      _
    $region3: #{tpu_custom_call.1} parent=1 // pred_check_branch
      %12 = sbr.rel (0) target = $region5
    $region4: #{tpu_custom_call.1} parent=1 // pred_region
      %14 = vsyncadd [#allocation4], 0
      %s15 = sshll.u32 %s0, 4
      %s16 = int_to_ptr.hbm [resolvable:$true] %s15
      %s17 = sshll.u32 [#allocation3], 4
      %s18 = int_to_ptr.vmem [resolvable:$true] %s17
      %23 = dma.hbm_to_vmem [thread:$0]  %s16, 768, %s18, [#allocation4], 256, 256, 16
    $region5: #{tpu_custom_call.1} parent=1 // pred_fallthru
      _
    // Predicated region
    $region6: #{tpu_custom_call.1} parent=1 // pred_check
      _
    $region7: #{tpu_custom_call.1} parent=1 // pred_check_branch
      %25 = sbr.rel (0) target = $region9
    $region8: #{tpu_custom_call.1} parent=1 // pred_region
      %27 = vsyncadd [#allocation7], 0
      %s28 = sshll.u32 %s1, 4
      %s29 = int_to_ptr.hbm [resolvable:$true] %s28
      %s30 = sshll.u32 [#allocation6], 4
      %s31 = int_to_ptr.vmem [resolvable:$true] %s30
      %36 = dma.hbm_to_vmem [thread:$0]  %s29, 32768, %s31, [#allocation7], 1024, 1024, 64
    $region9: #{tpu_custom_call.1} parent=1 // pred_fallthru
      _
    // Predicated region
    $region10: #{tpu_custom_call.1} parent=1 // pred_check
      _
    $region11: #{tpu_custom_call.1} parent=1 // pred_check_branch
      %38 = sbr.rel (0) target = $region13
    $region12: #{tpu_custom_call.1} parent=1 // pred_region
      %40 = vsyncadd [#allocation7], 0
      %s41 = sshll.u32 %s2, 4
      %s42 = int_to_ptr.hbm [resolvable:$true] %s41
      %s43 = sshll.u32 [#allocation8], 4
      %s44 = int_to_ptr.vmem [resolvable:$true] %s43
      %49 = dma.hbm_to_vmem [thread:$0]  %s42, 16384, %s44, [#allocation7], 256, 256, 16
    $region13: #{tpu_custom_call.1} parent=1 // pred_fallthru
      _
    // Predicated region
    $region14: #{tpu_custom_call.1} parent=1 // pred_check
      _
    $region15: #{tpu_custom_call.1} parent=1 // pred_check_branch
      %51 = sbr.rel (0) target = $region17
    $region16: #{tpu_custom_call.1} parent=1 // pred_region
      %53 = dma.done [#allocation4], 768
    $region17: #{tpu_custom_call.1} parent=1 // pred_fallthru
      _
    // Predicated region
    $region18: #{tpu_custom_call.1} parent=1 // pred_check
      _
    $region19: #{tpu_custom_call.1} parent=1 // pred_check_branch
      %55 = sbr.rel (0) target = $region21
    $region20: #{tpu_custom_call.1} parent=1 // pred_region
      %57 = dma.done [#allocation7], 32768
    $region21: #{tpu_custom_call.1} parent=1 // pred_fallthru
      _
    // Predicated region
    $region22: #{tpu_custom_call.1} parent=1 // pred_check
      _
    $region23: #{tpu_custom_call.1} parent=1 // pred_check_branch
      %59 = sbr.rel (0) target = $region25
    $region24: #{tpu_custom_call.1} parent=1 // pred_region
      %61 = dma.done [#allocation7], 16384
    $region25: #{tpu_custom_call.1} parent=1 // pred_fallthru
      _
    %p62 = scmp.eq.s32.totalorder 0, 0
    // Predicated region
    $region26: #{tpu_custom_call.1} parent=1 // pred_check
      %p63 = pneg %p62
    $region27: #{tpu_custom_call.1} parent=1 // pred_check_branch
      %65 = sbr.rel (%p63) target = $region29
    $region28: #{tpu_custom_call.1} parent=1 // pred_region
      %66 = vst [vmem:[#allocation2] sm:$0xff] 0.0
      %67 = vst [vmem:[#allocation2 + $0x8] sm:$0xff] 0.0
      %68 = vst [vmem:[#allocation2 + $0x10] sm:$0xff] 0.0
      %69 = vst [vmem:[#allocation2 + $0x18] sm:$0xff] 0.0
      %70 = vst [vmem:[#allocation2 + $0x20] sm:$0xff] 0.0
      %71 = vst [vmem:[#allocation2 + $0x28] sm:$0xff] 0.0
    $region29: #{tpu_custom_call.1} parent=1 // pred_fallthru
      _
    %v72 = vld [vmem:[#allocation3] sm:$0xff]
    %v73 = vld [vmem:[#allocation3 + $0x8] sm:$0xff]
    %v74 = vld [vmem:[#allocation3 + $0x10] sm:$0xff]
    %v75 = vld [vmem:[#allocation3 + $0x18] sm:$0xff]
    %v76 = vld [vmem:[#allocation3 + $0x20] sm:$0xff]
    %v77 = vld [vmem:[#allocation3 + $0x28] sm:$0xff]
    %v78 = vld [vmem:[#allocation6] sm:$0xff]
    %v79 = vld [vmem:[#allocation6 + $0x8] sm:$0xff]
    %v80 = vld [vmem:[#allocation6 + $0x10] sm:$0xff]
    %v81 = vld [vmem:[#allocation6 + $0x18] sm:$0xff]
    %v82 = vld [vmem:[#allocation6 + $0x20] sm:$0xff]
    %v83 = vld [vmem:[#allocation6 + $0x28] sm:$0xff]
    %v84 = vld [vmem:[#allocation6 + $0x30] sm:$0xff]
    %v85 = vld [vmem:[#allocation6 + $0x38] sm:$0xff]
    %v86 = vld [vmem:[#allocation6 + $0x40] sm:$0xff]
    %v87 = vld [vmem:[#allocation6 + $0x48] sm:$0xff]
    %v88 = vld [vmem:[#allocation6 + $0x50] sm:$0xff]
    %v89 = vld [vmem:[#allocation6 + $0x58] sm:$0xff]
    %v90 = vld [vmem:[#allocation6 + $0x60] sm:$0xff]
    %v91 = vld [vmem:[#allocation6 + $0x68] sm:$0xff]
    %v92 = vld [vmem:[#allocation6 + $0x70] sm:$0xff]
    %v93 = vld [vmem:[#allocation6 + $0x78] sm:$0xff]
    %v94 = vld [vmem:[#allocation6 + $0x80] sm:$0xff]
    %v95 = vld [vmem:[#allocation6 + $0x88] sm:$0xff]
    %v96 = vld [vmem:[#allocation6 + $0x90] sm:$0xff]
    %v97 = vld [vmem:[#allocation6 + $0x98] sm:$0xff]
    %v98 = vld [vmem:[#allocation6 + $0xa0] sm:$0xff]
    %v99 = vld [vmem:[#allocation6 + $0xa8] sm:$0xff]
    %v100 = vld [vmem:[#allocation6 + $0xb0] sm:$0xff]
    %v101 = vld [vmem:[#allocation6 + $0xb8] sm:$0xff]
    %v102 = vld [vmem:[#allocation6 + $0xc0] sm:$0xff]
    %v103 = vld [vmem:[#allocation6 + $0xc8] sm:$0xff]
    %v104 = vld [vmem:[#allocation6 + $0xd0] sm:$0xff]
    %v105 = vld [vmem:[#allocation6 + $0xd8] sm:$0xff]
    %v106 = vld [vmem:[#allocation6 + $0xe0] sm:$0xff]
    %v107 = vld [vmem:[#allocation6 + $0xe8] sm:$0xff]
    %v108 = vld [vmem:[#allocation6 + $0xf0] sm:$0xff]
    %v109 = vld [vmem:[#allocation6 + $0xf8] sm:$0xff]
    %v110 = vld [vmem:[#allocation6 + $0x100] sm:$0xff]
    %v111 = vld [vmem:[#allocation6 + $0x108] sm:$0xff]
    %v112 = vld [vmem:[#allocation6 + $0x110] sm:$0xff]
    %v113 = vld [vmem:[#allocation6 + $0x118] sm:$0xff]
    %v114 = vld [vmem:[#allocation6 + $0x120] sm:$0xff]
    %v115 = vld [vmem:[#allocation6 + $0x128] sm:$0xff]
    %v116 = vld [vmem:[#allocation6 + $0x130] sm:$0xff]
    %v117 = vld [vmem:[#allocation6 + $0x138] sm:$0xff]
    %v118 = vld [vmem:[#allocation6 + $0x140] sm:$0xff]
    %v119 = vld [vmem:[#allocation6 + $0x148] sm:$0xff]
    %v120 = vld [vmem:[#allocation6 + $0x150] sm:$0xff]
    %v121 = vld [vmem:[#allocation6 + $0x158] sm:$0xff]
    %v122 = vld [vmem:[#allocation6 + $0x160] sm:$0xff]
    %v123 = vld [vmem:[#allocation6 + $0x168] sm:$0xff]
    %v124 = vld [vmem:[#allocation6 + $0x170] sm:$0xff]
    %v125 = vld [vmem:[#allocation6 + $0x178] sm:$0xff]
    %v126 = vld [vmem:[#allocation6 + $0x180] sm:$0xff]
    %v127 = vld [vmem:[#allocation6 + $0x188] sm:$0xff]
    %v128 = vld [vmem:[#allocation6 + $0x190] sm:$0xff]
    %v129 = vld [vmem:[#allocation6 + $0x198] sm:$0xff]
    %v130 = vld [vmem:[#allocation6 + $0x1a0] sm:$0xff]
    %v131 = vld [vmem:[#allocation6 + $0x1a8] sm:$0xff]
    %v132 = vld [vmem:[#allocation6 + $0x1b0] sm:$0xff]
    %v133 = vld [vmem:[#allocation6 + $0x1b8] sm:$0xff]
    %v134 = vld [vmem:[#allocation6 + $0x1c0] sm:$0xff]
    %v135 = vld [vmem:[#allocation6 + $0x1c8] sm:$0xff]
    %v136 = vld [vmem:[#allocation6 + $0x1d0] sm:$0xff]
    %v137 = vld [vmem:[#allocation6 + $0x1d8] sm:$0xff]
    %v138 = vld [vmem:[#allocation6 + $0x1e0] sm:$0xff]
    %v139 = vld [vmem:[#allocation6 + $0x1e8] sm:$0xff]
    %v140 = vld [vmem:[#allocation6 + $0x1f0] sm:$0xff]
    %v141 = vld [vmem:[#allocation6 + $0x1f8] sm:$0xff]
    %v142 = vld [vmem:[#allocation6 + $0x200] sm:$0xff]
    %v143 = vld [vmem:[#allocation6 + $0x208] sm:$0xff]
    %v144 = vld [vmem:[#allocation6 + $0x210] sm:$0xff]
    %v145 = vld [vmem:[#allocation6 + $0x218] sm:$0xff]
    %v146 = vld [vmem:[#allocation6 + $0x220] sm:$0xff]
    %v147 = vld [vmem:[#allocation6 + $0x228] sm:$0xff]
    %v148 = vld [vmem:[#allocation6 + $0x230] sm:$0xff]
    %v149 = vld [vmem:[#allocation6 + $0x238] sm:$0xff]
    %v150 = vld [vmem:[#allocation6 + $0x240] sm:$0xff]
    %v151 = vld [vmem:[#allocation6 + $0x248] sm:$0xff]
    %v152 = vld [vmem:[#allocation6 + $0x250] sm:$0xff]
    %v153 = vld [vmem:[#allocation6 + $0x258] sm:$0xff]
    %v154 = vld [vmem:[#allocation6 + $0x260] sm:$0xff]
    %v155 = vld [vmem:[#allocation6 + $0x268] sm:$0xff]
    %v156 = vld [vmem:[#allocation6 + $0x270] sm:$0xff]
    %v157 = vld [vmem:[#allocation6 + $0x278] sm:$0xff]
    %v158 = vld [vmem:[#allocation6 + $0x280] sm:$0xff]
    %v159 = vld [vmem:[#allocation6 + $0x288] sm:$0xff]
    %v160 = vld [vmem:[#allocation6 + $0x290] sm:$0xff]
    %v161 = vld [vmem:[#allocation6 + $0x298] sm:$0xff]
    %v162 = vld [vmem:[#allocation6 + $0x2a0] sm:$0xff]
    %v163 = vld [vmem:[#allocation6 + $0x2a8] sm:$0xff]
    %v164 = vld [vmem:[#allocation6 + $0x2b0] sm:$0xff]
    %v165 = vld [vmem:[#allocation6 + $0x2b8] sm:$0xff]
    %v166 = vld [vmem:[#allocation6 + $0x2c0] sm:$0xff]
    %v167 = vld [vmem:[#allocation6 + $0x2c8] sm:$0xff]
    %v168 = vld [vmem:[#allocation6 + $0x2d0] sm:$0xff]
    %v169 = vld [vmem:[#allocation6 + $0x2d8] sm:$0xff]
    %v170 = vld [vmem:[#allocation6 + $0x2e0] sm:$0xff]
    %v171 = vld [vmem:[#allocation6 + $0x2e8] sm:$0xff]
    %v172 = vld [vmem:[#allocation6 + $0x2f0] sm:$0xff]
    %v173 = vld [vmem:[#allocation6 + $0x2f8] sm:$0xff]
    %v174 = vld [vmem:[#allocation6 + $0x300] sm:$0xff]
    %v175 = vld [vmem:[#allocation6 + $0x308] sm:$0xff]
    %v176 = vld [vmem:[#allocation6 + $0x310] sm:$0xff]
    %v177 = vld [vmem:[#allocation6 + $0x318] sm:$0xff]
    %v178 = vld [vmem:[#allocation6 + $0x320] sm:$0xff]
    %v179 = vld [vmem:[#allocation6 + $0x328] sm:$0xff]
    %v180 = vld [vmem:[#allocation6 + $0x330] sm:$0xff]
    %v181 = vld [vmem:[#allocation6 + $0x338] sm:$0xff]
    %v182 = vld [vmem:[#allocation6 + $0x340] sm:$0xff]
    %v183 = vld [vmem:[#allocation6 + $0x348] sm:$0xff]
    %v184 = vld [vmem:[#allocation6 + $0x350] sm:$0xff]
    %v185 = vld [vmem:[#allocation6 + $0x358] sm:$0xff]
    %v186 = vld [vmem:[#allocation6 + $0x360] sm:$0xff]
    %v187 = vld [vmem:[#allocation6 + $0x368] sm:$0xff]
    %v188 = vld [vmem:[#allocation6 + $0x370] sm:$0xff]
    %v189 = vld [vmem:[#allocation6 + $0x378] sm:$0xff]
    %v190 = vld [vmem:[#allocation6 + $0x380] sm:$0xff]
    %v191 = vld [vmem:[#allocation6 + $0x388] sm:$0xff]
    %v192 = vld [vmem:[#allocation6 + $0x390] sm:$0xff]
    %v193 = vld [vmem:[#allocation6 + $0x398] sm:$0xff]
    %v194 = vld [vmem:[#allocation6 + $0x3a0] sm:$0xff]
    %v195 = vld [vmem:[#allocation6 + $0x3a8] sm:$0xff]
    %v196 = vld [vmem:[#allocation6 + $0x3b0] sm:$0xff]
    %v197 = vld [vmem:[#allocation6 + $0x3b8] sm:$0xff]
    %v198 = vld [vmem:[#allocation6 + $0x3c0] sm:$0xff]
    %v199 = vld [vmem:[#allocation6 + $0x3c8] sm:$0xff]
    %v200 = vld [vmem:[#allocation6 + $0x3d0] sm:$0xff]
    %v201 = vld [vmem:[#allocation6 + $0x3d8] sm:$0xff]
    %v202 = vld [vmem:[#allocation6 + $0x3e0] sm:$0xff]
    %v203 = vld [vmem:[#allocation6 + $0x3e8] sm:$0xff]
    %v204 = vld [vmem:[#allocation6 + $0x3f0] sm:$0xff]
    %v205 = vld [vmem:[#allocation6 + $0x3f8] sm:$0xff]
    %v206 = vld [vmem:[#allocation6 + $0x400] sm:$0xff]
    %v207 = vld [vmem:[#allocation6 + $0x408] sm:$0xff]
    %v208 = vld [vmem:[#allocation6 + $0x410] sm:$0xff]
    %v209 = vld [vmem:[#allocation6 + $0x418] sm:$0xff]
    %v210 = vld [vmem:[#allocation6 + $0x420] sm:$0xff]
    %v211 = vld [vmem:[#allocation6 + $0x428] sm:$0xff]
    %v212 = vld [vmem:[#allocation6 + $0x430] sm:$0xff]
    %v213 = vld [vmem:[#allocation6 + $0x438] sm:$0xff]
    %v214 = vld [vmem:[#allocation6 + $0x440] sm:$0xff]
    %v215 = vld [vmem:[#allocation6 + $0x448] sm:$0xff]
    %v216 = vld [vmem:[#allocation6 + $0x450] sm:$0xff]
    %v217 = vld [vmem:[#allocation6 + $0x458] sm:$0xff]
    %v218 = vld [vmem:[#allocation6 + $0x460] sm:$0xff]
    %v219 = vld [vmem:[#allocation6 + $0x468] sm:$0xff]
    %v220 = vld [vmem:[#allocation6 + $0x470] sm:$0xff]
    %v221 = vld [vmem:[#allocation6 + $0x478] sm:$0xff]
    %v222 = vld [vmem:[#allocation6 + $0x480] sm:$0xff]
    %v223 = vld [vmem:[#allocation6 + $0x488] sm:$0xff]
    %v224 = vld [vmem:[#allocation6 + $0x490] sm:$0xff]
    %v225 = vld [vmem:[#allocation6 + $0x498] sm:$0xff]
    %v226 = vld [vmem:[#allocation6 + $0x4a0] sm:$0xff]
    %v227 = vld [vmem:[#allocation6 + $0x4a8] sm:$0xff]
    %v228 = vld [vmem:[#allocation6 + $0x4b0] sm:$0xff]
    %v229 = vld [vmem:[#allocation6 + $0x4b8] sm:$0xff]
    %v230 = vld [vmem:[#allocation6 + $0x4c0] sm:$0xff]
    %v231 = vld [vmem:[#allocation6 + $0x4c8] sm:$0xff]
    %v232 = vld [vmem:[#allocation6 + $0x4d0] sm:$0xff]
    %v233 = vld [vmem:[#allocation6 + $0x4d8] sm:$0xff]
    %v234 = vld [vmem:[#allocation6 + $0x4e0] sm:$0xff]
    %v235 = vld [vmem:[#allocation6 + $0x4e8] sm:$0xff]
    %v236 = vld [vmem:[#allocation6 + $0x4f0] sm:$0xff]
    %v237 = vld [vmem:[#allocation6 + $0x4f8] sm:$0xff]
    %v238 = vld [vmem:[#allocation6 + $0x500] sm:$0xff]
    %v239 = vld [vmem:[#allocation6 + $0x508] sm:$0xff]
    %v240 = vld [vmem:[#allocation6 + $0x510] sm:$0xff]
    %v241 = vld [vmem:[#allocation6 + $0x518] sm:$0xff]
    %v242 = vld [vmem:[#allocation6 + $0x520] sm:$0xff]
    %v243 = vld [vmem:[#allocation6 + $0x528] sm:$0xff]
    %v244 = vld [vmem:[#allocation6 + $0x530] sm:$0xff]
    %v245 = vld [vmem:[#allocation6 + $0x538] sm:$0xff]
    %v246 = vld [vmem:[#allocation6 + $0x540] sm:$0xff]
    %v247 = vld [vmem:[#allocation6 + $0x548] sm:$0xff]
    %v248 = vld [vmem:[#allocation6 + $0x550] sm:$0xff]
    %v249 = vld [vmem:[#allocation6 + $0x558] sm:$0xff]
    %v250 = vld [vmem:[#allocation6 + $0x560] sm:$0xff]
    %v251 = vld [vmem:[#allocation6 + $0x568] sm:$0xff]
    %v252 = vld [vmem:[#allocation6 + $0x570] sm:$0xff]
    %v253 = vld [vmem:[#allocation6 + $0x578] sm:$0xff]
    %v254 = vld [vmem:[#allocation6 + $0x580] sm:$0xff]
    %v255 = vld [vmem:[#allocation6 + $0x588] sm:$0xff]
    %v256 = vld [vmem:[#allocation6 + $0x590] sm:$0xff]
    %v257 = vld [vmem:[#allocation6 + $0x598] sm:$0xff]
    %v258 = vld [vmem:[#allocation6 + $0x5a0] sm:$0xff]
    %v259 = vld [vmem:[#allocation6 + $0x5a8] sm:$0xff]
    %v260 = vld [vmem:[#allocation6 + $0x5b0] sm:$0xff]
    %v261 = vld [vmem:[#allocation6 + $0x5b8] sm:$0xff]
    %v262 = vld [vmem:[#allocation6 + $0x5c0] sm:$0xff]
    %v263 = vld [vmem:[#allocation6 + $0x5c8] sm:$0xff]
    %v264 = vld [vmem:[#allocation6 + $0x5d0] sm:$0xff]
    %v265 = vld [vmem:[#allocation6 + $0x5d8] sm:$0xff]
    %v266 = vld [vmem:[#allocation6 + $0x5e0] sm:$0xff]
    %v267 = vld [vmem:[#allocation6 + $0x5e8] sm:$0xff]
    %v268 = vld [vmem:[#allocation6 + $0x5f0] sm:$0xff]
    %v269 = vld [vmem:[#allocation6 + $0x5f8] sm:$0xff]
    %v270 = vld [vmem:[#allocation6 + $0x600] sm:$0xff]
    %v271 = vld [vmem:[#allocation6 + $0x608] sm:$0xff]
    %v272 = vld [vmem:[#allocation6 + $0x610] sm:$0xff]
    %v273 = vld [vmem:[#allocation6 + $0x618] sm:$0xff]
    %v274 = vld [vmem:[#allocation6 + $0x620] sm:$0xff]
    %v275 = vld [vmem:[#allocation6 + $0x628] sm:$0xff]
    %v276 = vld [vmem:[#allocation6 + $0x630] sm:$0xff]
    %v277 = vld [vmem:[#allocation6 + $0x638] sm:$0xff]
    %v278 = vld [vmem:[#allocation6 + $0x640] sm:$0xff]
    %v279 = vld [vmem:[#allocation6 + $0x648] sm:$0xff]
    %v280 = vld [vmem:[#allocation6 + $0x650] sm:$0xff]
    %v281 = vld [vmem:[#allocation6 + $0x658] sm:$0xff]
    %v282 = vld [vmem:[#allocation6 + $0x660] sm:$0xff]
    %v283 = vld [vmem:[#allocation6 + $0x668] sm:$0xff]
    %v284 = vld [vmem:[#allocation6 + $0x670] sm:$0xff]
    %v285 = vld [vmem:[#allocation6 + $0x678] sm:$0xff]
    %v286 = vld [vmem:[#allocation6 + $0x680] sm:$0xff]
    %v287 = vld [vmem:[#allocation6 + $0x688] sm:$0xff]
    %v288 = vld [vmem:[#allocation6 + $0x690] sm:$0xff]
    %v289 = vld [vmem:[#allocation6 + $0x698] sm:$0xff]
    %v290 = vld [vmem:[#allocation6 + $0x6a0] sm:$0xff]
    %v291 = vld [vmem:[#allocation6 + $0x6a8] sm:$0xff]
    %v292 = vld [vmem:[#allocation6 + $0x6b0] sm:$0xff]
    %v293 = vld [vmem:[#allocation6 + $0x6b8] sm:$0xff]
    %v294 = vld [vmem:[#allocation6 + $0x6c0] sm:$0xff]
    %v295 = vld [vmem:[#allocation6 + $0x6c8] sm:$0xff]
    %v296 = vld [vmem:[#allocation6 + $0x6d0] sm:$0xff]
    %v297 = vld [vmem:[#allocation6 + $0x6d8] sm:$0xff]
    %v298 = vld [vmem:[#allocation6 + $0x6e0] sm:$0xff]
    %v299 = vld [vmem:[#allocation6 + $0x6e8] sm:$0xff]
    %v300 = vld [vmem:[#allocation6 + $0x6f0] sm:$0xff]
    %v301 = vld [vmem:[#allocation6 + $0x6f8] sm:$0xff]
    %v302 = vld [vmem:[#allocation6 + $0x700] sm:$0xff]
    %v303 = vld [vmem:[#allocation6 + $0x708] sm:$0xff]
    %v304 = vld [vmem:[#allocation6 + $0x710] sm:$0xff]
    %v305 = vld [vmem:[#allocation6 + $0x718] sm:$0xff]
    %v306 = vld [vmem:[#allocation6 + $0x720] sm:$0xff]
    %v307 = vld [vmem:[#allocation6 + $0x728] sm:$0xff]
    %v308 = vld [vmem:[#allocation6 + $0x730] sm:$0xff]
    %v309 = vld [vmem:[#allocation6 + $0x738] sm:$0xff]
    %v310 = vld [vmem:[#allocation6 + $0x740] sm:$0xff]
    %v311 = vld [vmem:[#allocation6 + $0x748] sm:$0xff]
    %v312 = vld [vmem:[#allocation6 + $0x750] sm:$0xff]
    %v313 = vld [vmem:[#allocation6 + $0x758] sm:$0xff]
    %v314 = vld [vmem:[#allocation6 + $0x760] sm:$0xff]
    %v315 = vld [vmem:[#allocation6 + $0x768] sm:$0xff]
    %v316 = vld [vmem:[#allocation6 + $0x770] sm:$0xff]
    %v317 = vld [vmem:[#allocation6 + $0x778] sm:$0xff]
    %v318 = vld [vmem:[#allocation6 + $0x780] sm:$0xff]
    %v319 = vld [vmem:[#allocation6 + $0x788] sm:$0xff]
    %v320 = vld [vmem:[#allocation6 + $0x790] sm:$0xff]
    %v321 = vld [vmem:[#allocation6 + $0x798] sm:$0xff]
    %v322 = vld [vmem:[#allocation6 + $0x7a0] sm:$0xff]
    %v323 = vld [vmem:[#allocation6 + $0x7a8] sm:$0xff]
    %v324 = vld [vmem:[#allocation6 + $0x7b0] sm:$0xff]
    %v325 = vld [vmem:[#allocation6 + $0x7b8] sm:$0xff]
    %v326 = vld [vmem:[#allocation6 + $0x7c0] sm:$0xff]
    %v327 = vld [vmem:[#allocation6 + $0x7c8] sm:$0xff]
    %v328 = vld [vmem:[#allocation6 + $0x7d0] sm:$0xff]
    %v329 = vld [vmem:[#allocation6 + $0x7d8] sm:$0xff]
    %v330 = vld [vmem:[#allocation6 + $0x7e0] sm:$0xff]
    %v331 = vld [vmem:[#allocation6 + $0x7e8] sm:$0xff]
    %v332 = vld [vmem:[#allocation6 + $0x7f0] sm:$0xff]
    %v333 = vld [vmem:[#allocation6 + $0x7f8] sm:$0xff]
    %334 = vmatpush.msra.mxu0 %v198
    %335 = vmatpush.msra.mxu0 %v190
    %336 = vmatpush.msra.mxu0 %v182
    %337 = vmatpush.msra.mxu0 %v174
    %338 = vmatpush.msra.mxu0 %v166
    %339 = vmatpush.msra.mxu0 %v158
    %340 = vmatpush.msra.mxu0 %v150
    %341 = vmatpush.msra.mxu0 %v142
    %342 = vmatpush.msra.mxu0 %v134
    %343 = vmatpush.msra.mxu0 %v126
    %344 = vmatpush.msra.mxu0 %v118
    %345 = vmatpush.msra.mxu0 %v110
    %346 = vmatpush.msra.mxu0 %v102
    %347 = vmatpush.msra.mxu0 %v94
    %348 = vmatpush.msra.mxu0 %v86
    %349 = vmatpush.msra.mxu0 %v78
    %350 = vmatmul.f32.gmra.mxu0 %v72
    %v351 = vpop.f32.mrf.mxu0
    %v352 = vadd.f32 0.0, %v351
    %353 = vmatmul.f32.gmra.mxu0 %v74
    %v354 = vpop.f32.mrf.mxu0
    %v355 = vadd.f32 0.0, %v354
    %356 = vmatmul.f32.gmra.mxu0 %v76
    %v357 = vpop.f32.mrf.mxu0
    %v358 = vadd.f32 0.0, %v357
    %359 = vdwg.mxu0
    %360 = vmatpush.msra.mxu0 %v326
    %361 = vmatpush.msra.mxu0 %v318
    %362 = vmatpush.msra.mxu0 %v310
    %363 = vmatpush.msra.mxu0 %v302
    %364 = vmatpush.msra.mxu0 %v294
    %365 = vmatpush.msra.mxu0 %v286
    %366 = vmatpush.msra.mxu0 %v278
    %367 = vmatpush.msra.mxu0 %v270
    %368 = vmatpush.msra.mxu0 %v262
    %369 = vmatpush.msra.mxu0 %v254
    %370 = vmatpush.msra.mxu0 %v246
    %371 = vmatpush.msra.mxu0 %v238
    %372 = vmatpush.msra.mxu0 %v230
    %373 = vmatpush.msra.mxu0 %v222
    %374 = vmatpush.msra.mxu0 %v214
    %375 = vmatpush.msra.mxu0 %v206
    %376 = vmatmul.f32.gmra.mxu0 %v73
    %v377 = vpop.f32.mrf.mxu0
    %v378 = vadd.f32 %v352, %v377
    %379 = vmatmul.f32.gmra.mxu0 %v75
    %v380 = vpop.f32.mrf.mxu0
    %v381 = vadd.f32 %v355, %v380
    %382 = vmatmul.f32.gmra.mxu0 %v77
    %v383 = vpop.f32.mrf.mxu0
    %v384 = vadd.f32 %v358, %v383
    %385 = vdwg.mxu0
    %386 = vmatpush.msra.mxu0 %v199
    %387 = vmatpush.msra.mxu0 %v191
    %388 = vmatpush.msra.mxu0 %v183
    %389 = vmatpush.msra.mxu0 %v175
    %390 = vmatpush.msra.mxu0 %v167
    %391 = vmatpush.msra.mxu0 %v159
    %392 = vmatpush.msra.mxu0 %v151
    %393 = vmatpush.msra.mxu0 %v143
    %394 = vmatpush.msra.mxu0 %v135
    %395 = vmatpush.msra.mxu0 %v127
    %396 = vmatpush.msra.mxu0 %v119
    %397 = vmatpush.msra.mxu0 %v111
    %398 = vmatpush.msra.mxu0 %v103
    %399 = vmatpush.msra.mxu0 %v95
    %400 = vmatpush.msra.mxu0 %v87
    %401 = vmatpush.msra.mxu0 %v79
    %402 = vmatmul.f32.gmra.mxu0 %v72
    %v403 = vpop.f32.mrf.mxu0
    %v404 = vadd.f32 0.0, %v403
    %405 = vmatmul.f32.gmra.mxu0 %v74
    %v406 = vpop.f32.mrf.mxu0
    %v407 = vadd.f32 0.0, %v406
    %408 = vmatmul.f32.gmra.mxu0 %v76
    %v409 = vpop.f32.mrf.mxu0
    %v410 = vadd.f32 0.0, %v409
    %411 = vdwg.mxu0
    %412 = vmatpush.msra.mxu0 %v327
    %413 = vmatpush.msra.mxu0 %v319
    %414 = vmatpush.msra.mxu0 %v311
    %415 = vmatpush.msra.mxu0 %v303
    %416 = vmatpush.msra.mxu0 %v295
    %417 = vmatpush.msra.mxu0 %v287
    %418 = vmatpush.msra.mxu0 %v279
    %419 = vmatpush.msra.mxu0 %v271
    %420 = vmatpush.msra.mxu0 %v263
    %421 = vmatpush.msra.mxu0 %v255
    %422 = vmatpush.msra.mxu0 %v247
    %423 = vmatpush.msra.mxu0 %v239
    %424 = vmatpush.msra.mxu0 %v231
    %425 = vmatpush.msra.mxu0 %v223
    %426 = vmatpush.msra.mxu0 %v215
    %427 = vmatpush.msra.mxu0 %v207
    %428 = vmatmul.f32.gmra.mxu0 %v73
    %v429 = vpop.f32.mrf.mxu0
    %v430 = vadd.f32 %v404, %v429
    %431 = vmatmul.f32.gmra.mxu0 %v75
    %v432 = vpop.f32.mrf.mxu0
    %v433 = vadd.f32 %v407, %v432
    %434 = vmatmul.f32.gmra.mxu0 %v77
    %v435 = vpop.f32.mrf.mxu0
    %v436 = vadd.f32 %v410, %v435
    %437 = vdwg.mxu0
    %438 = vmatpush.msra.mxu0 %v200
    %439 = vmatpush.msra.mxu0 %v192
    %440 = vmatpush.msra.mxu0 %v184
    %441 = vmatpush.msra.mxu0 %v176
    %442 = vmatpush.msra.mxu0 %v168
    %443 = vmatpush.msra.mxu0 %v160
    %444 = vmatpush.msra.mxu0 %v152
    %445 = vmatpush.msra.mxu0 %v144
    %446 = vmatpush.msra.mxu0 %v136
    %447 = vmatpush.msra.mxu0 %v128
    %448 = vmatpush.msra.mxu0 %v120
    %449 = vmatpush.msra.mxu0 %v112
    %450 = vmatpush.msra.mxu0 %v104
    %451 = vmatpush.msra.mxu0 %v96
    %452 = vmatpush.msra.mxu0 %v88
    %453 = vmatpush.msra.mxu0 %v80
    %454 = vmatmul.f32.gmra.mxu0 %v72
    %v455 = vpop.f32.mrf.mxu0
    %v456 = vadd.f32 0.0, %v455
    %457 = vmatmul.f32.gmra.mxu0 %v74
    %v458 = vpop.f32.mrf.mxu0
    %v459 = vadd.f32 0.0, %v458
    %460 = vmatmul.f32.gmra.mxu0 %v76
    %v461 = vpop.f32.mrf.mxu0
    %v462 = vadd.f32 0.0, %v461
    %463 = vdwg.mxu0
    %464 = vmatpush.msra.mxu0 %v328
    %465 = vmatpush.msra.mxu0 %v320
    %466 = vmatpush.msra.mxu0 %v312
    %467 = vmatpush.msra.mxu0 %v304
    %468 = vmatpush.msra.mxu0 %v296
    %469 = vmatpush.msra.mxu0 %v288
    %470 = vmatpush.msra.mxu0 %v280
    %471 = vmatpush.msra.mxu0 %v272
    %472 = vmatpush.msra.mxu0 %v264
    %473 = vmatpush.msra.mxu0 %v256
    %474 = vmatpush.msra.mxu0 %v248
    %475 = vmatpush.msra.mxu0 %v240
    %476 = vmatpush.msra.mxu0 %v232
    %477 = vmatpush.msra.mxu0 %v224
    %478 = vmatpush.msra.mxu0 %v216
    %479 = vmatpush.msra.mxu0 %v208
    %480 = vmatmul.f32.gmra.mxu0 %v73
    %v481 = vpop.f32.mrf.mxu0
    %v482 = vadd.f32 %v456, %v481
    %483 = vmatmul.f32.gmra.mxu0 %v75
    %v484 = vpop.f32.mrf.mxu0
    %v485 = vadd.f32 %v459, %v484
    %486 = vmatmul.f32.gmra.mxu0 %v77
    %v487 = vpop.f32.mrf.mxu0
    %v488 = vadd.f32 %v462, %v487
    %489 = vdwg.mxu0
    %490 = vmatpush.msra.mxu0 %v201
    %491 = vmatpush.msra.mxu0 %v193
    %492 = vmatpush.msra.mxu0 %v185
    %493 = vmatpush.msra.mxu0 %v177
    %494 = vmatpush.msra.mxu0 %v169
    %495 = vmatpush.msra.mxu0 %v161
    %496 = vmatpush.msra.mxu0 %v153
    %497 = vmatpush.msra.mxu0 %v145
    %498 = vmatpush.msra.mxu0 %v137
    %499 = vmatpush.msra.mxu0 %v129
    %500 = vmatpush.msra.mxu0 %v121
    %501 = vmatpush.msra.mxu0 %v113
    %502 = vmatpush.msra.mxu0 %v105
    %503 = vmatpush.msra.mxu0 %v97
    %504 = vmatpush.msra.mxu0 %v89
    %505 = vmatpush.msra.mxu0 %v81
    %506 = vmatmul.f32.gmra.mxu0 %v72
    %v507 = vpop.f32.mrf.mxu0
    %v508 = vadd.f32 0.0, %v507
    %509 = vmatmul.f32.gmra.mxu0 %v74
    %v510 = vpop.f32.mrf.mxu0
    %v511 = vadd.f32 0.0, %v510
    %512 = vmatmul.f32.gmra.mxu0 %v76
    %v513 = vpop.f32.mrf.mxu0
    %v514 = vadd.f32 0.0, %v513
    %515 = vdwg.mxu0
    %516 = vmatpush.msra.mxu0 %v329
    %517 = vmatpush.msra.mxu0 %v321
    %518 = vmatpush.msra.mxu0 %v313
    %519 = vmatpush.msra.mxu0 %v305
    %520 = vmatpush.msra.mxu0 %v297
    %521 = vmatpush.msra.mxu0 %v289
    %522 = vmatpush.msra.mxu0 %v281
    %523 = vmatpush.msra.mxu0 %v273
    %524 = vmatpush.msra.mxu0 %v265
    %525 = vmatpush.msra.mxu0 %v257
    %526 = vmatpush.msra.mxu0 %v249
    %527 = vmatpush.msra.mxu0 %v241
    %528 = vmatpush.msra.mxu0 %v233
    %529 = vmatpush.msra.mxu0 %v225
    %530 = vmatpush.msra.mxu0 %v217
    %531 = vmatpush.msra.mxu0 %v209
    %532 = vmatmul.f32.gmra.mxu0 %v73
    %v533 = vpop.f32.mrf.mxu0
    %v534 = vadd.f32 %v508, %v533
    %535 = vmatmul.f32.gmra.mxu0 %v75
    %v536 = vpop.f32.mrf.mxu0
    %v537 = vadd.f32 %v511, %v536
    %538 = vmatmul.f32.gmra.mxu0 %v77
    %v539 = vpop.f32.mrf.mxu0
    %v540 = vadd.f32 %v514, %v539
    %541 = vdwg.mxu0
    %542 = vmatpush.msra.mxu0 %v202
    %543 = vmatpush.msra.mxu0 %v194
    %544 = vmatpush.msra.mxu0 %v186
    %545 = vmatpush.msra.mxu0 %v178
    %546 = vmatpush.msra.mxu0 %v170
    %547 = vmatpush.msra.mxu0 %v162
    %548 = vmatpush.msra.mxu0 %v154
    %549 = vmatpush.msra.mxu0 %v146
    %550 = vmatpush.msra.mxu0 %v138
    %551 = vmatpush.msra.mxu0 %v130
    %552 = vmatpush.msra.mxu0 %v122
    %553 = vmatpush.msra.mxu0 %v114
    %554 = vmatpush.msra.mxu0 %v106
    %555 = vmatpush.msra.mxu0 %v98
    %556 = vmatpush.msra.mxu0 %v90
    %557 = vmatpush.msra.mxu0 %v82
    %558 = vmatmul.f32.gmra.mxu0 %v72
    %v559 = vpop.f32.mrf.mxu0
    %v560 = vadd.f32 0.0, %v559
    %561 = vmatmul.f32.gmra.mxu0 %v74
    %v562 = vpop.f32.mrf.mxu0
    %v563 = vadd.f32 0.0, %v562
    %564 = vmatmul.f32.gmra.mxu0 %v76
    %v565 = vpop.f32.mrf.mxu0
    %v566 = vadd.f32 0.0, %v565
    %567 = vdwg.mxu0
    %568 = vmatpush.msra.mxu0 %v330
    %569 = vmatpush.msra.mxu0 %v322
    %570 = vmatpush.msra.mxu0 %v314
    %571 = vmatpush.msra.mxu0 %v306
    %572 = vmatpush.msra.mxu0 %v298
    %573 = vmatpush.msra.mxu0 %v290
    %574 = vmatpush.msra.mxu0 %v282
    %575 = vmatpush.msra.mxu0 %v274
    %576 = vmatpush.msra.mxu0 %v266
    %577 = vmatpush.msra.mxu0 %v258
    %578 = vmatpush.msra.mxu0 %v250
    %579 = vmatpush.msra.mxu0 %v242
    %580 = vmatpush.msra.mxu0 %v234
    %581 = vmatpush.msra.mxu0 %v226
    %582 = vmatpush.msra.mxu0 %v218
    %583 = vmatpush.msra.mxu0 %v210
    %584 = vmatmul.f32.gmra.mxu0 %v73
    %v585 = vpop.f32.mrf.mxu0
    %v586 = vadd.f32 %v560, %v585
    %587 = vmatmul.f32.gmra.mxu0 %v75
    %v588 = vpop.f32.mrf.mxu0
    %v589 = vadd.f32 %v563, %v588
    %590 = vmatmul.f32.gmra.mxu0 %v77
    %v591 = vpop.f32.mrf.mxu0
    %v592 = vadd.f32 %v566, %v591
    %593 = vdwg.mxu0
    %594 = vmatpush.msra.mxu0 %v203
    %595 = vmatpush.msra.mxu0 %v195
    %596 = vmatpush.msra.mxu0 %v187
    %597 = vmatpush.msra.mxu0 %v179
    %598 = vmatpush.msra.mxu0 %v171
    %599 = vmatpush.msra.mxu0 %v163
    %600 = vmatpush.msra.mxu0 %v155
    %601 = vmatpush.msra.mxu0 %v147
    %602 = vmatpush.msra.mxu0 %v139
    %603 = vmatpush.msra.mxu0 %v131
    %604 = vmatpush.msra.mxu0 %v123
    %605 = vmatpush.msra.mxu0 %v115
    %606 = vmatpush.msra.mxu0 %v107
    %607 = vmatpush.msra.mxu0 %v99
    %608 = vmatpush.msra.mxu0 %v91
    %609 = vmatpush.msra.mxu0 %v83
    %610 = vmatmul.f32.gmra.mxu0 %v72
    %v611 = vpop.f32.mrf.mxu0
    %v612 = vadd.f32 0.0, %v611
    %613 = vmatmul.f32.gmra.mxu0 %v74
    %v614 = vpop.f32.mrf.mxu0
    %v615 = vadd.f32 0.0, %v614
    %616 = vmatmul.f32.gmra.mxu0 %v76
    %v617 = vpop.f32.mrf.mxu0
    %v618 = vadd.f32 0.0, %v617
    %619 = vdwg.mxu0
    %620 = vmatpush.msra.mxu0 %v331
    %621 = vmatpush.msra.mxu0 %v323
    %622 = vmatpush.msra.mxu0 %v315
    %623 = vmatpush.msra.mxu0 %v307
    %624 = vmatpush.msra.mxu0 %v299
    %625 = vmatpush.msra.mxu0 %v291
    %626 = vmatpush.msra.mxu0 %v283
    %627 = vmatpush.msra.mxu0 %v275
    %628 = vmatpush.msra.mxu0 %v267
    %629 = vmatpush.msra.mxu0 %v259
    %630 = vmatpush.msra.mxu0 %v251
    %631 = vmatpush.msra.mxu0 %v243
    %632 = vmatpush.msra.mxu0 %v235
    %633 = vmatpush.msra.mxu0 %v227
    %634 = vmatpush.msra.mxu0 %v219
    %635 = vmatpush.msra.mxu0 %v211
    %636 = vmatmul.f32.gmra.mxu0 %v73
    %v637 = vpop.f32.mrf.mxu0
    %v638 = vadd.f32 %v612, %v637
    %639 = vmatmul.f32.gmra.mxu0 %v75
    %v640 = vpop.f32.mrf.mxu0
    %v641 = vadd.f32 %v615, %v640
    %642 = vmatmul.f32.gmra.mxu0 %v77
    %v643 = vpop.f32.mrf.mxu0
    %v644 = vadd.f32 %v618, %v643
    %645 = vdwg.mxu0
    %646 = vmatpush.msra.mxu0 %v204
    %647 = vmatpush.msra.mxu0 %v196
    %648 = vmatpush.msra.mxu0 %v188
    %649 = vmatpush.msra.mxu0 %v180
    %650 = vmatpush.msra.mxu0 %v172
    %651 = vmatpush.msra.mxu0 %v164
    %652 = vmatpush.msra.mxu0 %v156
    %653 = vmatpush.msra.mxu0 %v148
    %654 = vmatpush.msra.mxu0 %v140
    %655 = vmatpush.msra.mxu0 %v132
    %656 = vmatpush.msra.mxu0 %v124
    %657 = vmatpush.msra.mxu0 %v116
    %658 = vmatpush.msra.mxu0 %v108
    %659 = vmatpush.msra.mxu0 %v100
    %660 = vmatpush.msra.mxu0 %v92
    %661 = vmatpush.msra.mxu0 %v84
    %662 = vmatmul.f32.gmra.mxu0 %v72
    %v663 = vpop.f32.mrf.mxu0
    %v664 = vadd.f32 0.0, %v663
    %665 = vmatmul.f32.gmra.mxu0 %v74
    %v666 = vpop.f32.mrf.mxu0
    %v667 = vadd.f32 0.0, %v666
    %668 = vmatmul.f32.gmra.mxu0 %v76
    %v669 = vpop.f32.mrf.mxu0
    %v670 = vadd.f32 0.0, %v669
    %671 = vdwg.mxu0
    %672 = vmatpush.msra.mxu0 %v332
    %673 = vmatpush.msra.mxu0 %v324
    %674 = vmatpush.msra.mxu0 %v316
    %675 = vmatpush.msra.mxu0 %v308
    %676 = vmatpush.msra.mxu0 %v300
    %677 = vmatpush.msra.mxu0 %v292
    %678 = vmatpush.msra.mxu0 %v284
    %679 = vmatpush.msra.mxu0 %v276
    %680 = vmatpush.msra.mxu0 %v268
    %681 = vmatpush.msra.mxu0 %v260
    %682 = vmatpush.msra.mxu0 %v252
    %683 = vmatpush.msra.mxu0 %v244
    %684 = vmatpush.msra.mxu0 %v236
    %685 = vmatpush.msra.mxu0 %v228
    %686 = vmatpush.msra.mxu0 %v220
    %687 = vmatpush.msra.mxu0 %v212
    %688 = vmatmul.f32.gmra.mxu0 %v73
    %v689 = vpop.f32.mrf.mxu0
    %v690 = vadd.f32 %v664, %v689
    %691 = vmatmul.f32.gmra.mxu0 %v75
    %v692 = vpop.f32.mrf.mxu0
    %v693 = vadd.f32 %v667, %v692
    %694 = vmatmul.f32.gmra.mxu0 %v77
    %v695 = vpop.f32.mrf.mxu0
    %v696 = vadd.f32 %v670, %v695
    %697 = vdwg.mxu0
    %698 = vmatpush.msra.mxu0 %v205
    %699 = vmatpush.msra.mxu0 %v197
    %700 = vmatpush.msra.mxu0 %v189
    %701 = vmatpush.msra.mxu0 %v181
    %702 = vmatpush.msra.mxu0 %v173
    %703 = vmatpush.msra.mxu0 %v165
    %704 = vmatpush.msra.mxu0 %v157
    %705 = vmatpush.msra.mxu0 %v149
    %706 = vmatpush.msra.mxu0 %v141
    %707 = vmatpush.msra.mxu0 %v133
    %708 = vmatpush.msra.mxu0 %v125
    %709 = vmatpush.msra.mxu0 %v117
    %710 = vmatpush.msra.mxu0 %v109
    %711 = vmatpush.msra.mxu0 %v101
    %712 = vmatpush.msra.mxu0 %v93
    %713 = vmatpush.msra.mxu0 %v85
    %714 = vmatmul.f32.gmra.mxu0 %v72
    %v715 = vpop.f32.mrf.mxu0
    %v716 = vadd.f32 0.0, %v715
    %717 = vmatmul.f32.gmra.mxu0 %v74
    %v718 = vpop.f32.mrf.mxu0
    %v719 = vadd.f32 0.0, %v718
    %720 = vmatmul.f32.gmra.mxu0 %v76
    %v721 = vpop.f32.mrf.mxu0
    %v722 = vadd.f32 0.0, %v721
    %723 = vdwg.mxu0
    %724 = vmatpush.msra.mxu0 %v333
    %725 = vmatpush.msra.mxu0 %v325
    %726 = vmatpush.msra.mxu0 %v317
    %727 = vmatpush.msra.mxu0 %v309
    %728 = vmatpush.msra.mxu0 %v301
    %729 = vmatpush.msra.mxu0 %v293
    %730 = vmatpush.msra.mxu0 %v285
    %731 = vmatpush.msra.mxu0 %v277
    %732 = vmatpush.msra.mxu0 %v269
    %733 = vmatpush.msra.mxu0 %v261
    %734 = vmatpush.msra.mxu0 %v253
    %735 = vmatpush.msra.mxu0 %v245
    %736 = vmatpush.msra.mxu0 %v237
    %737 = vmatpush.msra.mxu0 %v229
    %738 = vmatpush.msra.mxu0 %v221
    %739 = vmatpush.msra.mxu0 %v213
    %740 = vmatmul.f32.gmra.mxu0 %v73
    %v741 = vpop.f32.mrf.mxu0
    %v742 = vadd.f32 %v716, %v741
    %743 = vmatmul.f32.gmra.mxu0 %v75
    %v744 = vpop.f32.mrf.mxu0
    %v745 = vadd.f32 %v719, %v744
    %746 = vmatmul.f32.gmra.mxu0 %v77
    %v747 = vpop.f32.mrf.mxu0
    %v748 = vadd.f32 %v722, %v747
    %749 = vdwg.mxu0
    %v750 = vxor.u32 %v378, 2147483648
    %v751 = vxor.u32 %v430, 2147483648
    %v752 = vxor.u32 %v482, 2147483648
    %v753 = vxor.u32 %v534, 2147483648
    %v754 = vxor.u32 %v381, 2147483648
    %v755 = vxor.u32 %v433, 2147483648
    %v756 = vxor.u32 %v485, 2147483648
    %v757 = vxor.u32 %v537, 2147483648
    %v758 = vxor.u32 %v384, 2147483648
    %v759 = vxor.u32 %v436, 2147483648
    %v760 = vxor.u32 %v488, 2147483648
    %v761 = vxor.u32 %v540, 2147483648
    %v762 = vmul.f32 %v750, 1.442695
    %v763 = vpow.pop %v762
    %v764 = vmul.f32 %v751, 1.442695
    %v765 = vpow.pop %v764
    %v766 = vmul.f32 %v752, 1.442695
    %v767 = vpow.pop %v766
    %v768 = vmul.f32 %v753, 1.442695
    %v769 = vpow.pop %v768
    %v770 = vmul.f32 %v754, 1.442695
    %v771 = vpow.pop %v770
    %v772 = vmul.f32 %v755, 1.442695
    %v773 = vpow.pop %v772
    %v774 = vmul.f32 %v756, 1.442695
    %v775 = vpow.pop %v774
    %v776 = vmul.f32 %v757, 1.442695
    %v777 = vpow.pop %v776
    %v778 = vmul.f32 %v758, 1.442695
    %v779 = vpow.pop %v778
    %v780 = vmul.f32 %v759, 1.442695
    %v781 = vpow.pop %v780
    %v782 = vmul.f32 %v760, 1.442695
    %v783 = vpow.pop %v782
    %v784 = vmul.f32 %v761, 1.442695
    %v785 = vpow.pop %v784
    %v786 = vadd.f32 %v763, 1.0
    %v787 = vadd.f32 %v765, 1.0
    %v788 = vadd.f32 %v767, 1.0
    %v789 = vadd.f32 %v769, 1.0
    %v790 = vadd.f32 %v771, 1.0
    %v791 = vadd.f32 %v773, 1.0
    %v792 = vadd.f32 %v775, 1.0
    %v793 = vadd.f32 %v777, 1.0
    %v794 = vadd.f32 %v779, 1.0
    %v795 = vadd.f32 %v781, 1.0
    %v796 = vadd.f32 %v783, 1.0
    %v797 = vadd.f32 %v785, 1.0
    %v798 = vrcp.pop %v786
    %v799 = vmul.f32 %v786, %v798
    %v800 = vsub.f32 1.0, %v799
    %v801 = vmul.f32 %v798, %v800
    %v802 = vadd.f32 %v798, %v801
    %vm803 = vweird.f32 %v786
    %vm804 = vweird.f32 %v798
    %vm805 = vmor %vm803, %vm804
    %v806 = vsel %vm805, %v798, %v802
    %v807 = vand.u32 2147483647, %v786
    %vm808 = vcmp.eq.f32.partialorder %v807, 8.507059e+37
    %v809 = vand.u32 %v786, 2147483648
    %v810 = vor.u32 1.1754944e-38, %v809
    %v811 = vsel %vm808, %v810, %v806
    %v812 = vmul.f32 1.0, %v811
    %v813 = vrcp.pop %v787
    %v814 = vmul.f32 %v787, %v813
    %v815 = vsub.f32 1.0, %v814
    %v816 = vmul.f32 %v813, %v815
    %v817 = vadd.f32 %v813, %v816
    %vm818 = vweird.f32 %v787
    %vm819 = vweird.f32 %v813
    %vm820 = vmor %vm818, %vm819
    %v821 = vsel %vm820, %v813, %v817
    %v822 = vand.u32 2147483647, %v787
    %vm823 = vcmp.eq.f32.partialorder %v822, 8.507059e+37
    %v824 = vand.u32 %v787, 2147483648
    %v825 = vor.u32 1.1754944e-38, %v824
    %v826 = vsel %vm823, %v825, %v821
    %v827 = vmul.f32 1.0, %v826
    %v828 = vrcp.pop %v788
    %v829 = vmul.f32 %v788, %v828
    %v830 = vsub.f32 1.0, %v829
    %v831 = vmul.f32 %v828, %v830
    %v832 = vadd.f32 %v828, %v831
    %vm833 = vweird.f32 %v788
    %vm834 = vweird.f32 %v828
    %vm835 = vmor %vm833, %vm834
    %v836 = vsel %vm835, %v828, %v832
    %v837 = vand.u32 2147483647, %v788
    %vm838 = vcmp.eq.f32.partialorder %v837, 8.507059e+37
    %v839 = vand.u32 %v788, 2147483648
    %v840 = vor.u32 1.1754944e-38, %v839
    %v841 = vsel %vm838, %v840, %v836
    %v842 = vmul.f32 1.0, %v841
    %v843 = vrcp.pop %v789
    %v844 = vmul.f32 %v789, %v843
    %v845 = vsub.f32 1.0, %v844
    %v846 = vmul.f32 %v843, %v845
    %v847 = vadd.f32 %v843, %v846
    %vm848 = vweird.f32 %v789
    %vm849 = vweird.f32 %v843
    %vm850 = vmor %vm848, %vm849
    %v851 = vsel %vm850, %v843, %v847
    %v852 = vand.u32 2147483647, %v789
    %vm853 = vcmp.eq.f32.partialorder %v852, 8.507059e+37
    %v854 = vand.u32 %v789, 2147483648
    %v855 = vor.u32 1.1754944e-38, %v854
    %v856 = vsel %vm853, %v855, %v851
    %v857 = vmul.f32 1.0, %v856
    %v858 = vrcp.pop %v790
    %v859 = vmul.f32 %v790, %v858
    %v860 = vsub.f32 1.0, %v859
    %v861 = vmul.f32 %v858, %v860
    %v862 = vadd.f32 %v858, %v861
    %vm863 = vweird.f32 %v790
    %vm864 = vweird.f32 %v858
    %vm865 = vmor %vm863, %vm864
    %v866 = vsel %vm865, %v858, %v862
    %v867 = vand.u32 2147483647, %v790
    %vm868 = vcmp.eq.f32.partialorder %v867, 8.507059e+37
    %v869 = vand.u32 %v790, 2147483648
    %v870 = vor.u32 1.1754944e-38, %v869
    %v871 = vsel %vm868, %v870, %v866
    %v872 = vmul.f32 1.0, %v871
    %v873 = vrcp.pop %v791
    %v874 = vmul.f32 %v791, %v873
    %v875 = vsub.f32 1.0, %v874
    %v876 = vmul.f32 %v873, %v875
    %v877 = vadd.f32 %v873, %v876
    %vm878 = vweird.f32 %v791
    %vm879 = vweird.f32 %v873
    %vm880 = vmor %vm878, %vm879
    %v881 = vsel %vm880, %v873, %v877
    %v882 = vand.u32 2147483647, %v791
    %vm883 = vcmp.eq.f32.partialorder %v882, 8.507059e+37
    %v884 = vand.u32 %v791, 2147483648
    %v885 = vor.u32 1.1754944e-38, %v884
    %v886 = vsel %vm883, %v885, %v881
    %v887 = vmul.f32 1.0, %v886
    %v888 = vrcp.pop %v792
    %v889 = vmul.f32 %v792, %v888
    %v890 = vsub.f32 1.0, %v889
    %v891 = vmul.f32 %v888, %v890
    %v892 = vadd.f32 %v888, %v891
    %vm893 = vweird.f32 %v792
    %vm894 = vweird.f32 %v888
    %vm895 = vmor %vm893, %vm894
    %v896 = vsel %vm895, %v888, %v892
    %v897 = vand.u32 2147483647, %v792
    %vm898 = vcmp.eq.f32.partialorder %v897, 8.507059e+37
    %v899 = vand.u32 %v792, 2147483648
    %v900 = vor.u32 1.1754944e-38, %v899
    %v901 = vsel %vm898, %v900, %v896
    %v902 = vmul.f32 1.0, %v901
    %v903 = vrcp.pop %v793
    %v904 = vmul.f32 %v793, %v903
    %v905 = vsub.f32 1.0, %v904
    %v906 = vmul.f32 %v903, %v905
    %v907 = vadd.f32 %v903, %v906
    %vm908 = vweird.f32 %v793
    %vm909 = vweird.f32 %v903
    %vm910 = vmor %vm908, %vm909
    %v911 = vsel %vm910, %v903, %v907
    %v912 = vand.u32 2147483647, %v793
    %vm913 = vcmp.eq.f32.partialorder %v912, 8.507059e+37
    %v914 = vand.u32 %v793, 2147483648
    %v915 = vor.u32 1.1754944e-38, %v914
    %v916 = vsel %vm913, %v915, %v911
    %v917 = vmul.f32 1.0, %v916
    %v918 = vrcp.pop %v794
    %v919 = vmul.f32 %v794, %v918
    %v920 = vsub.f32 1.0, %v919
    %v921 = vmul.f32 %v918, %v920
    %v922 = vadd.f32 %v918, %v921
    %vm923 = vweird.f32 %v794
    %vm924 = vweird.f32 %v918
    %vm925 = vmor %vm923, %vm924
    %v926 = vsel %vm925, %v918, %v922
    %v927 = vand.u32 2147483647, %v794
    %vm928 = vcmp.eq.f32.partialorder %v927, 8.507059e+37
    %v929 = vand.u32 %v794, 2147483648
    %v930 = vor.u32 1.1754944e-38, %v929
    %v931 = vsel %vm928, %v930, %v926
    %v932 = vmul.f32 1.0, %v931
    %v933 = vrcp.pop %v795
    %v934 = vmul.f32 %v795, %v933
    %v935 = vsub.f32 1.0, %v934
    %v936 = vmul.f32 %v933, %v935
    %v937 = vadd.f32 %v933, %v936
    %vm938 = vweird.f32 %v795
    %vm939 = vweird.f32 %v933
    %vm940 = vmor %vm938, %vm939
    %v941 = vsel %vm940, %v933, %v937
    %v942 = vand.u32 2147483647, %v795
    %vm943 = vcmp.eq.f32.partialorder %v942, 8.507059e+37
    %v944 = vand.u32 %v795, 2147483648
    %v945 = vor.u32 1.1754944e-38, %v944
    %v946 = vsel %vm943, %v945, %v941
    %v947 = vmul.f32 1.0, %v946
    %v948 = vrcp.pop %v796
    %v949 = vmul.f32 %v796, %v948
    %v950 = vsub.f32 1.0, %v949
    %v951 = vmul.f32 %v948, %v950
    %v952 = vadd.f32 %v948, %v951
    %vm953 = vweird.f32 %v796
    %vm954 = vweird.f32 %v948
    %vm955 = vmor %vm953, %vm954
    %v956 = vsel %vm955, %v948, %v952
    %v957 = vand.u32 2147483647, %v796
    %vm958 = vcmp.eq.f32.partialorder %v957, 8.507059e+37
    %v959 = vand.u32 %v796, 2147483648
    %v960 = vor.u32 1.1754944e-38, %v959
    %v961 = vsel %vm958, %v960, %v956
    %v962 = vmul.f32 1.0, %v961
    %v963 = vrcp.pop %v797
    %v964 = vmul.f32 %v797, %v963
    %v965 = vsub.f32 1.0, %v964
    %v966 = vmul.f32 %v963, %v965
    %v967 = vadd.f32 %v963, %v966
    %vm968 = vweird.f32 %v797
    %vm969 = vweird.f32 %v963
    %vm970 = vmor %vm968, %vm969
    %v971 = vsel %vm970, %v963, %v967
    %v972 = vand.u32 2147483647, %v797
    %vm973 = vcmp.eq.f32.partialorder %v972, 8.507059e+37
    %v974 = vand.u32 %v797, 2147483648
    %v975 = vor.u32 1.1754944e-38, %v974
    %v976 = vsel %vm973, %v975, %v971
    %v977 = vmul.f32 1.0, %v976
    %v978 = vmul.f32 %v378, %v812
    %v979 = vmul.f32 %v430, %v827
    %v980 = vmul.f32 %v482, %v842
    %v981 = vmul.f32 %v534, %v857
    %v982 = vmul.f32 %v381, %v872
    %v983 = vmul.f32 %v433, %v887
    %v984 = vmul.f32 %v485, %v902
    %v985 = vmul.f32 %v537, %v917
    %v986 = vmul.f32 %v384, %v932
    %v987 = vmul.f32 %v436, %v947
    %v988 = vmul.f32 %v488, %v962
    %v989 = vmul.f32 %v540, %v977
    %v990 = vmul.f32 %v978, %v586
    %v991 = vmul.f32 %v979, %v638
    %v992 = vmul.f32 %v980, %v690
    %v993 = vmul.f32 %v981, %v742
    %v994 = vmul.f32 %v982, %v589
    %v995 = vmul.f32 %v983, %v641
    %v996 = vmul.f32 %v984, %v693
    %v997 = vmul.f32 %v985, %v745
    %v998 = vmul.f32 %v986, %v592
    %v999 = vmul.f32 %v987, %v644
    %v1000 = vmul.f32 %v988, %v696
    %v1001 = vmul.f32 %v989, %v748
    %v1002 = vld [vmem:[#allocation2] sm:$0xff]
    %v1003 = vld [vmem:[#allocation2 + $0x8] sm:$0xff]
    %v1004 = vld [vmem:[#allocation2 + $0x10] sm:$0xff]
    %v1005 = vld [vmem:[#allocation2 + $0x18] sm:$0xff]
    %v1006 = vld [vmem:[#allocation2 + $0x20] sm:$0xff]
    %v1007 = vld [vmem:[#allocation2 + $0x28] sm:$0xff]
    %v1008 = vld [vmem:[#allocation8] sm:$0xff]
    %v1009 = vld [vmem:[#allocation8 + $0x8] sm:$0xff]
    %v1010 = vld [vmem:[#allocation8 + $0x10] sm:$0xff]
    %v1011 = vld [vmem:[#allocation8 + $0x18] sm:$0xff]
    %v1012 = vld [vmem:[#allocation8 + $0x20] sm:$0xff]
    %v1013 = vld [vmem:[#allocation8 + $0x28] sm:$0xff]
    %v1014 = vld [vmem:[#allocation8 + $0x30] sm:$0xff]
    %v1015 = vld [vmem:[#allocation8 + $0x38] sm:$0xff]
    %v1016 = vld [vmem:[#allocation8 + $0x40] sm:$0xff]
    %v1017 = vld [vmem:[#allocation8 + $0x48] sm:$0xff]
    %v1018 = vld [vmem:[#allocation8 + $0x50] sm:$0xff]
    %v1019 = vld [vmem:[#allocation8 + $0x58] sm:$0xff]
    %v1020 = vld [vmem:[#allocation8 + $0x60] sm:$0xff]
    %v1021 = vld [vmem:[#allocation8 + $0x68] sm:$0xff]
    %v1022 = vld [vmem:[#allocation8 + $0x70] sm:$0xff]
    %v1023 = vld [vmem:[#allocation8 + $0x78] sm:$0xff]
    %v1024 = vld [vmem:[#allocation8 + $0x80] sm:$0xff]
    %v1025 = vld [vmem:[#allocation8 + $0x88] sm:$0xff]
    %v1026 = vld [vmem:[#allocation8 + $0x90] sm:$0xff]
    %v1027 = vld [vmem:[#allocation8 + $0x98] sm:$0xff]
    %v1028 = vld [vmem:[#allocation8 + $0xa0] sm:$0xff]
    %v1029 = vld [vmem:[#allocation8 + $0xa8] sm:$0xff]
    %v1030 = vld [vmem:[#allocation8 + $0xb0] sm:$0xff]
    %v1031 = vld [vmem:[#allocation8 + $0xb8] sm:$0xff]
    %v1032 = vld [vmem:[#allocation8 + $0xc0] sm:$0xff]
    %v1033 = vld [vmem:[#allocation8 + $0xc8] sm:$0xff]
    %v1034 = vld [vmem:[#allocation8 + $0xd0] sm:$0xff]
    %v1035 = vld [vmem:[#allocation8 + $0xd8] sm:$0xff]
    %v1036 = vld [vmem:[#allocation8 + $0xe0] sm:$0xff]
    %v1037 = vld [vmem:[#allocation8 + $0xe8] sm:$0xff]
    %v1038 = vld [vmem:[#allocation8 + $0xf0] sm:$0xff]
    %v1039 = vld [vmem:[#allocation8 + $0xf8] sm:$0xff]
    %v1040 = vld [vmem:[#allocation8 + $0x100] sm:$0xff]
    %v1041 = vld [vmem:[#allocation8 + $0x108] sm:$0xff]
    %v1042 = vld [vmem:[#allocation8 + $0x110] sm:$0xff]
    %v1043 = vld [vmem:[#allocation8 + $0x118] sm:$0xff]
    %v1044 = vld [vmem:[#allocation8 + $0x120] sm:$0xff]
    %v1045 = vld [vmem:[#allocation8 + $0x128] sm:$0xff]
    %v1046 = vld [vmem:[#allocation8 + $0x130] sm:$0xff]
    %v1047 = vld [vmem:[#allocation8 + $0x138] sm:$0xff]
    %v1048 = vld [vmem:[#allocation8 + $0x140] sm:$0xff]
    %v1049 = vld [vmem:[#allocation8 + $0x148] sm:$0xff]
    %v1050 = vld [vmem:[#allocation8 + $0x150] sm:$0xff]
    %v1051 = vld [vmem:[#allocation8 + $0x158] sm:$0xff]
    %v1052 = vld [vmem:[#allocation8 + $0x160] sm:$0xff]
    %v1053 = vld [vmem:[#allocation8 + $0x168] sm:$0xff]
    %v1054 = vld [vmem:[#allocation8 + $0x170] sm:$0xff]
    %v1055 = vld [vmem:[#allocation8 + $0x178] sm:$0xff]
    %v1056 = vld [vmem:[#allocation8 + $0x180] sm:$0xff]
    %v1057 = vld [vmem:[#allocation8 + $0x188] sm:$0xff]
    %v1058 = vld [vmem:[#allocation8 + $0x190] sm:$0xff]
    %v1059 = vld [vmem:[#allocation8 + $0x198] sm:$0xff]
    %v1060 = vld [vmem:[#allocation8 + $0x1a0] sm:$0xff]
    %v1061 = vld [vmem:[#allocation8 + $0x1a8] sm:$0xff]
    %v1062 = vld [vmem:[#allocation8 + $0x1b0] sm:$0xff]
    %v1063 = vld [vmem:[#allocation8 + $0x1b8] sm:$0xff]
    %v1064 = vld [vmem:[#allocation8 + $0x1c0] sm:$0xff]
    %v1065 = vld [vmem:[#allocation8 + $0x1c8] sm:$0xff]
    %v1066 = vld [vmem:[#allocation8 + $0x1d0] sm:$0xff]
    %v1067 = vld [vmem:[#allocation8 + $0x1d8] sm:$0xff]
    %v1068 = vld [vmem:[#allocation8 + $0x1e0] sm:$0xff]
    %v1069 = vld [vmem:[#allocation8 + $0x1e8] sm:$0xff]
    %v1070 = vld [vmem:[#allocation8 + $0x1f0] sm:$0xff]
    %v1071 = vld [vmem:[#allocation8 + $0x1f8] sm:$0xff]
    %v1072 = vld [vmem:[#allocation8 + $0x200] sm:$0xff]
    %v1073 = vld [vmem:[#allocation8 + $0x208] sm:$0xff]
    %v1074 = vld [vmem:[#allocation8 + $0x210] sm:$0xff]
    %v1075 = vld [vmem:[#allocation8 + $0x218] sm:$0xff]
    %v1076 = vld [vmem:[#allocation8 + $0x220] sm:$0xff]
    %v1077 = vld [vmem:[#allocation8 + $0x228] sm:$0xff]
    %v1078 = vld [vmem:[#allocation8 + $0x230] sm:$0xff]
    %v1079 = vld [vmem:[#allocation8 + $0x238] sm:$0xff]
    %v1080 = vld [vmem:[#allocation8 + $0x240] sm:$0xff]
    %v1081 = vld [vmem:[#allocation8 + $0x248] sm:$0xff]
    %v1082 = vld [vmem:[#allocation8 + $0x250] sm:$0xff]
    %v1083 = vld [vmem:[#allocation8 + $0x258] sm:$0xff]
    %v1084 = vld [vmem:[#allocation8 + $0x260] sm:$0xff]
    %v1085 = vld [vmem:[#allocation8 + $0x268] sm:$0xff]
    %v1086 = vld [vmem:[#allocation8 + $0x270] sm:$0xff]
    %v1087 = vld [vmem:[#allocation8 + $0x278] sm:$0xff]
    %v1088 = vld [vmem:[#allocation8 + $0x280] sm:$0xff]
    %v1089 = vld [vmem:[#allocation8 + $0x288] sm:$0xff]
    %v1090 = vld [vmem:[#allocation8 + $0x290] sm:$0xff]
    %v1091 = vld [vmem:[#allocation8 + $0x298] sm:$0xff]
    %v1092 = vld [vmem:[#allocation8 + $0x2a0] sm:$0xff]
    %v1093 = vld [vmem:[#allocation8 + $0x2a8] sm:$0xff]
    %v1094 = vld [vmem:[#allocation8 + $0x2b0] sm:$0xff]
    %v1095 = vld [vmem:[#allocation8 + $0x2b8] sm:$0xff]
    %v1096 = vld [vmem:[#allocation8 + $0x2c0] sm:$0xff]
    %v1097 = vld [vmem:[#allocation8 + $0x2c8] sm:$0xff]
    %v1098 = vld [vmem:[#allocation8 + $0x2d0] sm:$0xff]
    %v1099 = vld [vmem:[#allocation8 + $0x2d8] sm:$0xff]
    %v1100 = vld [vmem:[#allocation8 + $0x2e0] sm:$0xff]
    %v1101 = vld [vmem:[#allocation8 + $0x2e8] sm:$0xff]
    %v1102 = vld [vmem:[#allocation8 + $0x2f0] sm:$0xff]
    %v1103 = vld [vmem:[#allocation8 + $0x2f8] sm:$0xff]
    %v1104 = vld [vmem:[#allocation8 + $0x300] sm:$0xff]
    %v1105 = vld [vmem:[#allocation8 + $0x308] sm:$0xff]
    %v1106 = vld [vmem:[#allocation8 + $0x310] sm:$0xff]
    %v1107 = vld [vmem:[#allocation8 + $0x318] sm:$0xff]
    %v1108 = vld [vmem:[#allocation8 + $0x320] sm:$0xff]
    %v1109 = vld [vmem:[#allocation8 + $0x328] sm:$0xff]
    %v1110 = vld [vmem:[#allocation8 + $0x330] sm:$0xff]
    %v1111 = vld [vmem:[#allocation8 + $0x338] sm:$0xff]
    %v1112 = vld [vmem:[#allocation8 + $0x340] sm:$0xff]
    %v1113 = vld [vmem:[#allocation8 + $0x348] sm:$0xff]
    %v1114 = vld [vmem:[#allocation8 + $0x350] sm:$0xff]
    %v1115 = vld [vmem:[#allocation8 + $0x358] sm:$0xff]
    %v1116 = vld [vmem:[#allocation8 + $0x360] sm:$0xff]
    %v1117 = vld [vmem:[#allocation8 + $0x368] sm:$0xff]
    %v1118 = vld [vmem:[#allocation8 + $0x370] sm:$0xff]
    %v1119 = vld [vmem:[#allocation8 + $0x378] sm:$0xff]
    %v1120 = vld [vmem:[#allocation8 + $0x380] sm:$0xff]
    %v1121 = vld [vmem:[#allocation8 + $0x388] sm:$0xff]
    %v1122 = vld [vmem:[#allocation8 + $0x390] sm:$0xff]
    %v1123 = vld [vmem:[#allocation8 + $0x398] sm:$0xff]
    %v1124 = vld [vmem:[#allocation8 + $0x3a0] sm:$0xff]
    %v1125 = vld [vmem:[#allocation8 + $0x3a8] sm:$0xff]
    %v1126 = vld [vmem:[#allocation8 + $0x3b0] sm:$0xff]
    %v1127 = vld [vmem:[#allocation8 + $0x3b8] sm:$0xff]
    %v1128 = vld [vmem:[#allocation8 + $0x3c0] sm:$0xff]
    %v1129 = vld [vmem:[#allocation8 + $0x3c8] sm:$0xff]
    %v1130 = vld [vmem:[#allocation8 + $0x3d0] sm:$0xff]
    %v1131 = vld [vmem:[#allocation8 + $0x3d8] sm:$0xff]
    %v1132 = vld [vmem:[#allocation8 + $0x3e0] sm:$0xff]
    %v1133 = vld [vmem:[#allocation8 + $0x3e8] sm:$0xff]
    %v1134 = vld [vmem:[#allocation8 + $0x3f0] sm:$0xff]
    %v1135 = vld [vmem:[#allocation8 + $0x3f8] sm:$0xff]
    %1136 = vmatpush.msra.mxu0 %v1038
    %1137 = vmatpush.msra.mxu0 %v1036
    %1138 = vmatpush.msra.mxu0 %v1034
    %1139 = vmatpush.msra.mxu0 %v1032
    %1140 = vmatpush.msra.mxu0 %v1030
    %1141 = vmatpush.msra.mxu0 %v1028
    %1142 = vmatpush.msra.mxu0 %v1026
    %1143 = vmatpush.msra.mxu0 %v1024
    %1144 = vmatpush.msra.mxu0 %v1022
    %1145 = vmatpush.msra.mxu0 %v1020
    %1146 = vmatpush.msra.mxu0 %v1018
    %1147 = vmatpush.msra.mxu0 %v1016
    %1148 = vmatpush.msra.mxu0 %v1014
    %1149 = vmatpush.msra.mxu0 %v1012
    %1150 = vmatpush.msra.mxu0 %v1010
    %1151 = vmatpush.msra.mxu0 %v1008
    %1152 = vmatmul.f32.gmra.mxu0 %v990
    %v1153 = vpop.f32.mrf.mxu0
    %v1154 = vadd.f32 0.0, %v1153
    %1155 = vmatmul.f32.gmra.mxu0 %v994
    %v1156 = vpop.f32.mrf.mxu0
    %v1157 = vadd.f32 0.0, %v1156
    %1158 = vmatmul.f32.gmra.mxu0 %v998
    %v1159 = vpop.f32.mrf.mxu0
    %v1160 = vadd.f32 0.0, %v1159
    %1161 = vdwg.mxu0
    %1162 = vmatpush.msra.mxu0 %v1070
    %1163 = vmatpush.msra.mxu0 %v1068
    %1164 = vmatpush.msra.mxu0 %v1066
    %1165 = vmatpush.msra.mxu0 %v1064
    %1166 = vmatpush.msra.mxu0 %v1062
    %1167 = vmatpush.msra.mxu0 %v1060
    %1168 = vmatpush.msra.mxu0 %v1058
    %1169 = vmatpush.msra.mxu0 %v1056
    %1170 = vmatpush.msra.mxu0 %v1054
    %1171 = vmatpush.msra.mxu0 %v1052
    %1172 = vmatpush.msra.mxu0 %v1050
    %1173 = vmatpush.msra.mxu0 %v1048
    %1174 = vmatpush.msra.mxu0 %v1046
    %1175 = vmatpush.msra.mxu0 %v1044
    %1176 = vmatpush.msra.mxu0 %v1042
    %1177 = vmatpush.msra.mxu0 %v1040
    %1178 = vmatmul.f32.gmra.mxu0 %v991
    %v1179 = vpop.f32.mrf.mxu0
    %v1180 = vadd.f32 %v1154, %v1179
    %1181 = vmatmul.f32.gmra.mxu0 %v995
    %v1182 = vpop.f32.mrf.mxu0
    %v1183 = vadd.f32 %v1157, %v1182
    %1184 = vmatmul.f32.gmra.mxu0 %v999
    %v1185 = vpop.f32.mrf.mxu0
    %v1186 = vadd.f32 %v1160, %v1185
    %1187 = vdwg.mxu0
    %1188 = vmatpush.msra.mxu0 %v1102
    %1189 = vmatpush.msra.mxu0 %v1100
    %1190 = vmatpush.msra.mxu0 %v1098
    %1191 = vmatpush.msra.mxu0 %v1096
    %1192 = vmatpush.msra.mxu0 %v1094
    %1193 = vmatpush.msra.mxu0 %v1092
    %1194 = vmatpush.msra.mxu0 %v1090
    %1195 = vmatpush.msra.mxu0 %v1088
    %1196 = vmatpush.msra.mxu0 %v1086
    %1197 = vmatpush.msra.mxu0 %v1084
    %1198 = vmatpush.msra.mxu0 %v1082
    %1199 = vmatpush.msra.mxu0 %v1080
    %1200 = vmatpush.msra.mxu0 %v1078
    %1201 = vmatpush.msra.mxu0 %v1076
    %1202 = vmatpush.msra.mxu0 %v1074
    %1203 = vmatpush.msra.mxu0 %v1072
    %1204 = vmatmul.f32.gmra.mxu0 %v992
    %v1205 = vpop.f32.mrf.mxu0
    %v1206 = vadd.f32 %v1180, %v1205
    %1207 = vmatmul.f32.gmra.mxu0 %v996
    %v1208 = vpop.f32.mrf.mxu0
    %v1209 = vadd.f32 %v1183, %v1208
    %1210 = vmatmul.f32.gmra.mxu0 %v1000
    %v1211 = vpop.f32.mrf.mxu0
    %v1212 = vadd.f32 %v1186, %v1211
    %1213 = vdwg.mxu0
    %1214 = vmatpush.msra.mxu0 %v1134
    %1215 = vmatpush.msra.mxu0 %v1132
    %1216 = vmatpush.msra.mxu0 %v1130
    %1217 = vmatpush.msra.mxu0 %v1128
    %1218 = vmatpush.msra.mxu0 %v1126
    %1219 = vmatpush.msra.mxu0 %v1124
    %1220 = vmatpush.msra.mxu0 %v1122
    %1221 = vmatpush.msra.mxu0 %v1120
    %1222 = vmatpush.msra.mxu0 %v1118
    %1223 = vmatpush.msra.mxu0 %v1116
    %1224 = vmatpush.msra.mxu0 %v1114
    %1225 = vmatpush.msra.mxu0 %v1112
    %1226 = vmatpush.msra.mxu0 %v1110
    %1227 = vmatpush.msra.mxu0 %v1108
    %1228 = vmatpush.msra.mxu0 %v1106
    %1229 = vmatpush.msra.mxu0 %v1104
    %1230 = vmatmul.f32.gmra.mxu0 %v993
    %v1231 = vpop.f32.mrf.mxu0
    %v1232 = vadd.f32 %v1206, %v1231
    %1233 = vmatmul.f32.gmra.mxu0 %v997
    %v1234 = vpop.f32.mrf.mxu0
    %v1235 = vadd.f32 %v1209, %v1234
    %1236 = vmatmul.f32.gmra.mxu0 %v1001
    %v1237 = vpop.f32.mrf.mxu0
    %v1238 = vadd.f32 %v1212, %v1237
    %1239 = vdwg.mxu0
    %1240 = vmatpush.msra.mxu0 %v1039
    %1241 = vmatpush.msra.mxu0 %v1037
    %1242 = vmatpush.msra.mxu0 %v1035
    %1243 = vmatpush.msra.mxu0 %v1033
    %1244 = vmatpush.msra.mxu0 %v1031
    %1245 = vmatpush.msra.mxu0 %v1029
    %1246 = vmatpush.msra.mxu0 %v1027
    %1247 = vmatpush.msra.mxu0 %v1025
    %1248 = vmatpush.msra.mxu0 %v1023
    %1249 = vmatpush.msra.mxu0 %v1021
    %1250 = vmatpush.msra.mxu0 %v1019
    %1251 = vmatpush.msra.mxu0 %v1017
    %1252 = vmatpush.msra.mxu0 %v1015
    %1253 = vmatpush.msra.mxu0 %v1013
    %1254 = vmatpush.msra.mxu0 %v1011
    %1255 = vmatpush.msra.mxu0 %v1009
    %1256 = vmatmul.f32.gmra.mxu0 %v990
    %v1257 = vpop.f32.mrf.mxu0
    %v1258 = vadd.f32 0.0, %v1257
    %1259 = vmatmul.f32.gmra.mxu0 %v994
    %v1260 = vpop.f32.mrf.mxu0
    %v1261 = vadd.f32 0.0, %v1260
    %1262 = vmatmul.f32.gmra.mxu0 %v998
    %v1263 = vpop.f32.mrf.mxu0
    %v1264 = vadd.f32 0.0, %v1263
    %1265 = vdwg.mxu0
    %1266 = vmatpush.msra.mxu0 %v1071
    %1267 = vmatpush.msra.mxu0 %v1069
    %1268 = vmatpush.msra.mxu0 %v1067
    %1269 = vmatpush.msra.mxu0 %v1065
    %1270 = vmatpush.msra.mxu0 %v1063
    %1271 = vmatpush.msra.mxu0 %v1061
    %1272 = vmatpush.msra.mxu0 %v1059
    %1273 = vmatpush.msra.mxu0 %v1057
    %1274 = vmatpush.msra.mxu0 %v1055
    %1275 = vmatpush.msra.mxu0 %v1053
    %1276 = vmatpush.msra.mxu0 %v1051
    %1277 = vmatpush.msra.mxu0 %v1049
    %1278 = vmatpush.msra.mxu0 %v1047
    %1279 = vmatpush.msra.mxu0 %v1045
    %1280 = vmatpush.msra.mxu0 %v1043
    %1281 = vmatpush.msra.mxu0 %v1041
    %1282 = vmatmul.f32.gmra.mxu0 %v991
    %v1283 = vpop.f32.mrf.mxu0
    %v1284 = vadd.f32 %v1258, %v1283
    %1285 = vmatmul.f32.gmra.mxu0 %v995
    %v1286 = vpop.f32.mrf.mxu0
    %v1287 = vadd.f32 %v1261, %v1286
    %1288 = vmatmul.f32.gmra.mxu0 %v999
    %v1289 = vpop.f32.mrf.mxu0
    %v1290 = vadd.f32 %v1264, %v1289
    %1291 = vdwg.mxu0
    %1292 = vmatpush.msra.mxu0 %v1103
    %1293 = vmatpush.msra.mxu0 %v1101
    %1294 = vmatpush.msra.mxu0 %v1099
    %1295 = vmatpush.msra.mxu0 %v1097
    %1296 = vmatpush.msra.mxu0 %v1095
    %1297 = vmatpush.msra.mxu0 %v1093
    %1298 = vmatpush.msra.mxu0 %v1091
    %1299 = vmatpush.msra.mxu0 %v1089
    %1300 = vmatpush.msra.mxu0 %v1087
    %1301 = vmatpush.msra.mxu0 %v1085
    %1302 = vmatpush.msra.mxu0 %v1083
    %1303 = vmatpush.msra.mxu0 %v1081
    %1304 = vmatpush.msra.mxu0 %v1079
    %1305 = vmatpush.msra.mxu0 %v1077
    %1306 = vmatpush.msra.mxu0 %v1075
    %1307 = vmatpush.msra.mxu0 %v1073
    %1308 = vmatmul.f32.gmra.mxu0 %v992
    %v1309 = vpop.f32.mrf.mxu0
    %v1310 = vadd.f32 %v1284, %v1309
    %1311 = vmatmul.f32.gmra.mxu0 %v996
    %v1312 = vpop.f32.mrf.mxu0
    %v1313 = vadd.f32 %v1287, %v1312
    %1314 = vmatmul.f32.gmra.mxu0 %v1000
    %v1315 = vpop.f32.mrf.mxu0
    %v1316 = vadd.f32 %v1290, %v1315
    %1317 = vdwg.mxu0
    %1318 = vmatpush.msra.mxu0 %v1135
    %1319 = vmatpush.msra.mxu0 %v1133
    %1320 = vmatpush.msra.mxu0 %v1131
    %1321 = vmatpush.msra.mxu0 %v1129
    %1322 = vmatpush.msra.mxu0 %v1127
    %1323 = vmatpush.msra.mxu0 %v1125
    %1324 = vmatpush.msra.mxu0 %v1123
    %1325 = vmatpush.msra.mxu0 %v1121
    %1326 = vmatpush.msra.mxu0 %v1119
    %1327 = vmatpush.msra.mxu0 %v1117
    %1328 = vmatpush.msra.mxu0 %v1115
    %1329 = vmatpush.msra.mxu0 %v1113
    %1330 = vmatpush.msra.mxu0 %v1111
    %1331 = vmatpush.msra.mxu0 %v1109
    %1332 = vmatpush.msra.mxu0 %v1107
    %1333 = vmatpush.msra.mxu0 %v1105
    %1334 = vmatmul.f32.gmra.mxu0 %v993
    %v1335 = vpop.f32.mrf.mxu0
    %v1336 = vadd.f32 %v1310, %v1335
    %1337 = vmatmul.f32.gmra.mxu0 %v997
    %v1338 = vpop.f32.mrf.mxu0
    %v1339 = vadd.f32 %v1313, %v1338
    %1340 = vmatmul.f32.gmra.mxu0 %v1001
    %v1341 = vpop.f32.mrf.mxu0
    %v1342 = vadd.f32 %v1316, %v1341
    %1343 = vdwg.mxu0
    %v1344 = vadd.f32 %v1002, %v1232
    %v1345 = vadd.f32 %v1003, %v1336
    %v1346 = vadd.f32 %v1004, %v1235
    %v1347 = vadd.f32 %v1005, %v1339
    %v1348 = vadd.f32 %v1006, %v1238
    %v1349 = vadd.f32 %v1007, %v1342
    %1350 = vst [vmem:[#allocation2] sm:$0xff] %v1344
    %1351 = vst [vmem:[#allocation2 + $0x8] sm:$0xff] %v1345
    %1352 = vst [vmem:[#allocation2 + $0x10] sm:$0xff] %v1346
    %1353 = vst [vmem:[#allocation2 + $0x18] sm:$0xff] %v1347
    %1354 = vst [vmem:[#allocation2 + $0x20] sm:$0xff] %v1348
    %1355 = vst [vmem:[#allocation2 + $0x28] sm:$0xff] %v1349
    // Predicated region
    $region30: #{tpu_custom_call.1} parent=1 // pred_check
      %p1356 = pneg %p62
    $region31: #{tpu_custom_call.1} parent=1 // pred_check_branch
      %1358 = sbr.rel (%p1356) target = $region33
    $region32: #{tpu_custom_call.1} parent=1 // pred_region
      %v1359 = vld [vmem:[#allocation2] sm:$0xff]
      %v1360 = vld [vmem:[#allocation2 + $0x8] sm:$0xff]
      %v1361 = vld [vmem:[#allocation2 + $0x10] sm:$0xff]
      %v1362 = vld [vmem:[#allocation2 + $0x18] sm:$0xff]
      %v1363 = vld [vmem:[#allocation2 + $0x20] sm:$0xff]
      %v1364 = vld [vmem:[#allocation2 + $0x28] sm:$0xff]
      %1365 = vst [vmem:[#allocation9] sm:$0xff] %v1359
      %1366 = vst [vmem:[#allocation9 + $0x8] sm:$0xff] %v1360
      %1367 = vst [vmem:[#allocation9 + $0x10] sm:$0xff] %v1361
      %1368 = vst [vmem:[#allocation9 + $0x18] sm:$0xff] %v1362
      %1369 = vst [vmem:[#allocation9 + $0x20] sm:$0xff] %v1363
      %1370 = vst [vmem:[#allocation9 + $0x28] sm:$0xff] %v1364
    $region33: #{tpu_custom_call.1} parent=1 // pred_fallthru
      _
    // Predicated region
    $region34: #{tpu_custom_call.1} parent=1 // pred_check
      _
    $region35: #{tpu_custom_call.1} parent=1 // pred_check_branch
      %1372 = sbr.rel (0) target = $region37
    $region36: #{tpu_custom_call.1} parent=1 // pred_region
      %1374 = vsyncadd [#allocation5], 0
      %s1375 = sshll.u32 [#allocation9], 4
      %s1376 = int_to_ptr.vmem [resolvable:$true] %s1375
      %s1377 = sshll.u32 %s3, 4
      %s1378 = int_to_ptr.hbm [resolvable:$true] %s1377
      %1383 = dma.vmem_to_hbm [thread:$0]  %s1376, 768, %s1378, [#allocation5], 256, 256, 16
    $region37: #{tpu_custom_call.1} parent=1 // pred_fallthru
      _
    // Predicated region
    $region38: #{tpu_custom_call.1} parent=1 // pred_check
      _
    $region39: #{tpu_custom_call.1} parent=1 // pred_check_branch
      %1385 = sbr.rel (0) target = $region41
    $region40: #{tpu_custom_call.1} parent=1 // pred_region
      %1387 = dma.done [#allocation5], 768
    $region41: #{tpu_custom_call.1} parent=1 // pred_fallthru
      _
    %1388 = vsyncpa [#allocation4], 1
    %1389 = vsyncpa [#allocation7], 1
    %1390 = vsyncpa [#allocation5], 1

</llo_original>
